<compile_context>
chip_gen: v6e
topology: v6e:2x2x1
jax: 0.10.0
libtpu: 0.0.40
codegen_flags: <defaults>
</compile_context>

<pallas_src>
import functools

import jax
import jax.numpy as jnp
from jax.experimental import pallas as pl
from jax.experimental.pallas import tpu as pltpu


def _pad_to_lanes(d):
    """Round a feature dim up to a multiple of 128 lanes (min 128)."""
    return max(128, ((d + 127) // 128) * 128)


def _pick_graphs_per_step(b):
    """Pack graphs per grid step (fills MXU M dim) while keeping >=2 grid
    steps when possible so a 'parallel' batch axis can feed both v7x cores."""
    for steps in (2, 4, 8):
        if b % steps == 0:
            return b // steps
    return 1


def _group_gcn_kernel(out_channels,
                      x_ref, ah_ref, at_ref, w1_ref, w2_ref, out_ref):
    f32 = jnp.float32
    bt, n, c = x_ref.shape
    w1 = w1_ref[...]          # (C, 3*HP)  [center | beta*homo | (1-beta)*het]
    w2 = w2_ref[...]          # (HP, 3*OP)
    hp = w1.shape[1] // 3
    op = w2.shape[1] // 3
    ah = ah_ref[...]          # (Bt, N, N) GCN-normalized homo adjacency
    at = at_ref[...]          # (Bt, N, N) GCN-normalized hetero adjacency

    # ----- layer 1: one fused projection over all Bt*N rows -----------------
    xw = jnp.dot(x_ref[...].reshape(bt * n, c), w1,
                 preferred_element_type=f32).reshape(bt, n, 3 * hp)
    h1 = xw[:, :, :hp]
    h1 = h1 + jnp.einsum('gij,gjk->gik', ah, xw[:, :, hp:2 * hp],
                         preferred_element_type=f32)
    h1 = h1 + jnp.einsum('gij,gjk->gik', at, xw[:, :, 2 * hp:],
                         preferred_element_type=f32)
    h1 = jnp.maximum(h1, 0.0)                                  # ReLU

    # ----- layer 2 -----------------------------------------------------------
    hw = jnp.dot(h1.reshape(bt * n, hp), w2,
                 preferred_element_type=f32).reshape(bt, n, 3 * op)
    hf = hw[:, :, :op]
    hf = hf + jnp.einsum('gij,gjk->gik', ah, hw[:, :, op:2 * op],
                         preferred_element_type=f32)
    hf = hf + jnp.einsum('gij,gjk->gik', at, hw[:, :, 2 * op:],
                         preferred_element_type=f32)

    # ----- masked softmax / log_softmax over the lane-padded feature axis ----
    col = jax.lax.broadcasted_iota(jnp.int32, (bt, n, op), 2)
    hfm = jnp.where(col < out_channels, hf, f32(-1e30))
    m = jnp.max(hfm, axis=2, keepdims=True)
    shifted = hfm - m
    e = jnp.exp(shifted)                 # padded lanes underflow to exactly 0
    s = jnp.sum(e, axis=2, keepdims=True)
    logsoft = shifted - jnp.log(s)
    soft = e * pl.reciprocal(s)          # tiny (Bt,N,1) recip + VALU mul; no 2nd exp
    out_ref[:, :, :op] = soft.astype(out_ref.dtype)
    out_ref[:, :, op:] = logsoft.astype(out_ref.dtype)


def group_gcn_forward_batched(x, a_homo, a_het, params, beta,
                              *, graphs_per_step=None):
    """Batched GroupGCN forward.

    x:       (B, N, C)  node features per graph
    a_homo:  (B, N, N)  GCN-normalized homo adjacency (dense)
    a_het:   (B, N, N)  GCN-normalized hetero adjacency (dense)
    params:  dict of 6 weight matrices (wc1, wh1, wt1, wc2, wh2, wt2)
    beta:    scalar (traced — changing it never recompiles)
    returns  (softmax, log_softmax), each (B, N, out_channels)
    """
    b, n, c = x.shape
    out = params["wc2"].shape[1]
    hp = _pad_to_lanes(params["wc1"].shape[1])
    op = _pad_to_lanes(out)

    bt = _pick_graphs_per_step(b) if graphs_per_step is None else graphs_per_step
    assert b % bt == 0, "graphs_per_step must divide the batch"
    steps = b // bt

    beta = jnp.asarray(beta, jnp.float32)

    def pad2(w, rows, cols):
        return jnp.pad(w.astype(jnp.float32),
                       ((0, rows - w.shape[0]), (0, cols - w.shape[1])))

    # Fold beta / (1-beta) into the homo/hetero weights of BOTH layers so the
    # kernel never scales A and the adjacencies stay unscaled in HBM.
    w1_cat = jnp.concatenate(
        [pad2(params["wc1"], c, hp),
         beta * pad2(params["wh1"], c, hp),
         (1.0 - beta) * pad2(params["wt1"], c, hp)], axis=1)      # (C, 3*HP)
    w2_cat = jnp.concatenate(
        [pad2(params["wc2"], hp, op),
         beta * pad2(params["wh2"], hp, op),
         (1.0 - beta) * pad2(params["wt2"], hp, op)], axis=1)     # (HP, 3*OP)

    # VMEM budget: double-buffered input/output tiles + weights + the largest
    # live intermediates, with 2x headroom (clamped to a safe range).
    f32b = 4
    est = f32b * (2 * (bt * n * c + 2 * bt * n * n)          # x, A_homo, A_het (x2 bufs)
                  + 2 * (c * 3 * hp + hp * 3 * op)            # weights (x2 bufs)
                  + 2 * (bt * n * 2 * op)                     # packed output (x2 bufs)
                  + bt * n * (3 * hp + hp + 3 * op + 3 * op)) # xw, h1, hw, soft/log
    vmem_limit = int(min(max(2 * est, 32 * 2**20), 96 * 2**20))

    kernel = functools.partial(_group_gcn_kernel, out)
    packed = pl.pallas_call(
        kernel,
        grid=(steps,),
        out_shape=jax.ShapeDtypeStruct((b, n, 2 * op), jnp.float32),
        in_specs=[
            pl.BlockSpec((bt, n, c), lambda i: (i, 0, 0)),
            pl.BlockSpec((bt, n, n), lambda i: (i, 0, 0)),
            pl.BlockSpec((bt, n, n), lambda i: (i, 0, 0)),
            # Grid-invariant weights (constant index_map). A
            # pipeline_mode=pl.Buffered(1) here would save one weight buffer
            # under v7x's 64 MiB VMEM; omitted since weights are tiny here.
            pl.BlockSpec((c, 3 * hp), lambda i: (0, 0)),
            pl.BlockSpec((hp, 3 * op), lambda i: (0, 0)),
        ],
        out_specs=pl.BlockSpec((bt, n, 2 * op), lambda i: (i, 0, 0)),
        compiler_params=pltpu.CompilerParams(
            dimension_semantics=("parallel",),
            vmem_limit_bytes=vmem_limit),
    )(x.astype(jnp.float32), a_homo.astype(jnp.float32),
      a_het.astype(jnp.float32), w1_cat, w2_cat)

    soft = packed[:, :, :out]
    logsoft = packed[:, :, op:op + out]
    return soft, logsoft


def group_gcn_forward(x, a_homo, a_het, params, beta):
    """Single-graph wrapper matching the PyTorch module's forward signature."""
    soft, logsoft = group_gcn_forward_batched(
        x[None], a_homo[None], a_het[None], params, beta)
    return soft[0], logsoft[0]


def normalized_adjacency(edge_index, num_nodes):
    """Dense GCN-normalized adjacency (no self loops), matching torch_geometric
    gcn_norm with add_self_loops=False: A_hat[dst, src] = d_dst^-1/2 d_src^-1/2."""
    src, dst = edge_index[0], edge_index[1]
    a = jnp.zeros((num_nodes, num_nodes), jnp.float32).at[dst, src].add(1.0)
    deg = a.sum(axis=1)
    dinv = jnp.where(deg > 0, 1.0 / jnp.sqrt(jnp.maximum(deg, 1e-12)), 0.0)
    return dinv[:, None] * a * dinv[None, :]


def _init_params(key, in_channels, hidden_channels, out_channels):
    ks = jax.random.split(key, 6)

    def w(k, fan_in, fan_out):
        lim = (6.0 / (fan_in + fan_out)) ** 0.5
        return jax.random.uniform(k, (fan_in, fan_out), jnp.float32, -lim, lim)

    return {
        "wc1": w(ks[0], in_channels, hidden_channels),
        "wh1": w(ks[1], in_channels, hidden_channels),
        "wt1": w(ks[2], in_channels, hidden_channels),
        "wc2": w(ks[3], hidden_channels, out_channels),
        "wh2": w(ks[4], hidden_channels, out_channels),
        "wt2": w(ks[5], hidden_channels, out_channels),
    }


if __name__ == "__main__":
    key = jax.random.PRNGKey(0)
    k_x, k_p, k_e = jax.random.split(key, 3)

    num_graphs = 4            # even batch -> 2 parallel grid steps, 2 graphs each
    num_nodes = 32
    in_channels, hidden_channels, out_channels = 16, 32, 8
    beta = 0.5
    num_edges = 64

    x = jax.random.normal(k_x, (num_graphs, num_nodes, in_channels), jnp.float32)
    params = _init_params(k_p, in_channels, hidden_channels, out_channels)

    edge_keys = jax.random.split(k_e, 2 * num_graphs)
    a_homo = jnp.stack([
        normalized_adjacency(
            jax.random.randint(edge_keys[2 * g], (2, num_edges), 0, num_nodes),
            num_nodes)
        for g in range(num_graphs)])
    a_het = jnp.stack([
        normalized_adjacency(
            jax.random.randint(edge_keys[2 * g + 1], (2, num_edges), 0, num_nodes),
            num_nodes)
        for g in range(num_graphs)])

    fwd = jax.jit(group_gcn_forward_batched)
    soft, logsoft = fwd(x, a_homo, a_het, params, beta)
    jax.block_until_ready((soft, logsoft))

    # quick sanity check against a plain-JAX per-graph reference
    def ref(x1, ah, at, p, b):
        h1 = (x1 @ p["wc1"] + b * (ah @ (x1 @ p["wh1"]))
              + (1 - b) * (at @ (x1 @ p["wt1"])))
        h1 = jnp.maximum(h1, 0.0)
        hf = (h1 @ p["wc2"] + b * (ah @ (h1 @ p["wh2"]))
              + (1 - b) * (at @ (h1 @ p["wt2"])))
        return jax.nn.softmax(hf, axis=1), jax.nn.log_softmax(hf, axis=1)

    for g in range(num_graphs):
        rs, rl = ref(x[g], a_homo[g], a_het[g], params, beta)
        assert jnp.allclose(soft[g], rs, atol=1e-4, rtol=1e-4), "softmax mismatch"
        assert jnp.allclose(logsoft[g], rl, atol=1e-4, rtol=1e-4), "log_softmax mismatch"

    print("KERNEL_OK")
</pallas_src>

<mosaic_0001>
module attributes {stable_mosaic.version = 11 : i64} {
  func.func @_group_gcn_kernel(%arg0: i32, %arg1: memref<2x32x16xf32, #tpu.memory_space<vmem>>, %arg2: memref<2x32x32xf32, #tpu.memory_space<vmem>>, %arg3: memref<2x32x32xf32, #tpu.memory_space<vmem>>, %arg4: memref<16x384xf32, #tpu.memory_space<vmem>>, %arg5: memref<128x384xf32, #tpu.memory_space<vmem>>, %arg6: memref<2x32x256xf32, #tpu.memory_space<vmem>>) attributes {dimension_semantics = [#tpu.dimension_semantics<parallel>], iteration_bounds = array<i64: 2>, scalar_prefetch = 0 : i64, scratch_operands = 0 : i64, tpu.core_type = #tpu.core_type<tc>, window_params = [{transform_indices = @transform_0, window_bounds = array<i64: 2, 32, 16>}, {transform_indices = @transform_1, window_bounds = array<i64: 2, 32, 32>}, {transform_indices = @transform_2, window_bounds = array<i64: 2, 32, 32>}, {pipeline_mode = #tpu.pipeline_mode<synchronous>, transform_indices = @transform_3, window_bounds = array<i64: 16, 384>}, {pipeline_mode = #tpu.pipeline_mode<synchronous>, transform_indices = @transform_4, window_bounds = array<i64: 128, 384>}, {transform_indices = @transform_5, window_bounds = array<i64: 2, 32, 256>}]} {
    %c0 = arith.constant 0 : index
    %c0_0 = arith.constant 0 : index
    %0 = vector.load %arg4[%c0, %c0_0] : memref<16x384xf32, #tpu.memory_space<vmem>>, vector<16x384xf32>
    %c0_1 = arith.constant 0 : index
    %c0_2 = arith.constant 0 : index
    %1 = vector.load %arg5[%c0_1, %c0_2] : memref<128x384xf32, #tpu.memory_space<vmem>>, vector<128x384xf32>
    %c0_3 = arith.constant 0 : index
    %c0_4 = arith.constant 0 : index
    %c0_5 = arith.constant 0 : index
    %2 = vector.load %arg2[%c0_3, %c0_4, %c0_5] : memref<2x32x32xf32, #tpu.memory_space<vmem>>, vector<2x32x32xf32>
    %c0_6 = arith.constant 0 : index
    %c0_7 = arith.constant 0 : index
    %c0_8 = arith.constant 0 : index
    %3 = vector.load %arg3[%c0_6, %c0_7, %c0_8] : memref<2x32x32xf32, #tpu.memory_space<vmem>>, vector<2x32x32xf32>
    %c0_9 = arith.constant 0 : index
    %c0_10 = arith.constant 0 : index
    %c0_11 = arith.constant 0 : index
    %4 = vector.load %arg1[%c0_9, %c0_10, %c0_11] : memref<2x32x16xf32, #tpu.memory_space<vmem>>, vector<2x32x16xf32>
    %5 = vector.shape_cast %4 : vector<2x32x16xf32> to vector<64x16xf32>
    %cst = arith.constant dense<0.000000e+00> : vector<64x384xf32>
    %6 = tpu.matmul %5, %0, %cst {dimension_numbers = #tpu.dot_dimension_numbers<[1], [0], [0], [1], [0, 0, 1, 1], [], []>} : vector<64x16xf32>, vector<16x384xf32>, vector<64x384xf32> -> vector<64x384xf32>
    %7 = vector.shape_cast %6 : vector<64x384xf32> to vector<2x32x384xf32>
    %8 = vector.extract_strided_slice %7 {offsets = [0, 0, 0], sizes = [2, 32, 128], strides = [1, 1, 1]} : vector<2x32x384xf32> to vector<2x32x128xf32>
    %9 = vector.extract_strided_slice %7 {offsets = [0, 0, 128], sizes = [2, 32, 128], strides = [1, 1, 1]} : vector<2x32x384xf32> to vector<2x32x128xf32>
    "tpu.trace_start"() <{level = 10 : i32, message = "gij,gjk->gik"}> : () -> ()
    %cst_12 = arith.constant dense<0.000000e+00> : vector<2x32x128xf32>
    %10 = tpu.matmul %2, %9, %cst_12 {dimension_numbers = #tpu.dot_dimension_numbers<[2], [1], [1], [2], [0, 0, 0, 1, 1, 2], [0], [0]>} : vector<2x32x32xf32>, vector<2x32x128xf32>, vector<2x32x128xf32> -> vector<2x32x128xf32>
    "tpu.trace_stop"() : () -> ()
    %11 = arith.addf %8, %10 : vector<2x32x128xf32>
    %12 = vector.extract_strided_slice %7 {offsets = [0, 0, 256], sizes = [2, 32, 128], strides = [1, 1, 1]} : vector<2x32x384xf32> to vector<2x32x128xf32>
    "tpu.trace_start"() <{level = 10 : i32, message = "gij,gjk->gik"}> : () -> ()
    %cst_13 = arith.constant dense<0.000000e+00> : vector<2x32x128xf32>
    %13 = tpu.matmul %3, %12, %cst_13 {dimension_numbers = #tpu.dot_dimension_numbers<[2], [1], [1], [2], [0, 0, 0, 1, 1, 2], [0], [0]>} : vector<2x32x32xf32>, vector<2x32x128xf32>, vector<2x32x128xf32> -> vector<2x32x128xf32>
    "tpu.trace_stop"() : () -> ()
    %14 = arith.addf %11, %13 : vector<2x32x128xf32>
    %cst_14 = arith.constant 0.000000e+00 : f32
    %15 = vector.broadcast %cst_14 : f32 to vector<2x32x128xf32>
    %16 = arith.maximumf %14, %15 : vector<2x32x128xf32>
    %17 = vector.shape_cast %16 : vector<2x32x128xf32> to vector<64x128xf32>
    %cst_15 = arith.constant dense<0.000000e+00> : vector<64x384xf32>
    %18 = tpu.matmul %17, %1, %cst_15 {dimension_numbers = #tpu.dot_dimension_numbers<[1], [0], [0], [1], [0, 0, 1, 1], [], []>} : vector<64x128xf32>, vector<128x384xf32>, vector<64x384xf32> -> vector<64x384xf32>
    %19 = vector.shape_cast %18 : vector<64x384xf32> to vector<2x32x384xf32>
    %20 = vector.extract_strided_slice %19 {offsets = [0, 0, 0], sizes = [2, 32, 128], strides = [1, 1, 1]} : vector<2x32x384xf32> to vector<2x32x128xf32>
    %21 = vector.extract_strided_slice %19 {offsets = [0, 0, 128], sizes = [2, 32, 128], strides = [1, 1, 1]} : vector<2x32x384xf32> to vector<2x32x128xf32>
    "tpu.trace_start"() <{level = 10 : i32, message = "gij,gjk->gik"}> : () -> ()
    %cst_16 = arith.constant dense<0.000000e+00> : vector<2x32x128xf32>
    %22 = tpu.matmul %2, %21, %cst_16 {dimension_numbers = #tpu.dot_dimension_numbers<[2], [1], [1], [2], [0, 0, 0, 1, 1, 2], [0], [0]>} : vector<2x32x32xf32>, vector<2x32x128xf32>, vector<2x32x128xf32> -> vector<2x32x128xf32>
    "tpu.trace_stop"() : () -> ()
    %23 = arith.addf %20, %22 : vector<2x32x128xf32>
    %24 = vector.extract_strided_slice %19 {offsets = [0, 0, 256], sizes = [2, 32, 128], strides = [1, 1, 1]} : vector<2x32x384xf32> to vector<2x32x128xf32>
    "tpu.trace_start"() <{level = 10 : i32, message = "gij,gjk->gik"}> : () -> ()
    %cst_17 = arith.constant dense<0.000000e+00> : vector<2x32x128xf32>
    %25 = tpu.matmul %3, %24, %cst_17 {dimension_numbers = #tpu.dot_dimension_numbers<[2], [1], [1], [2], [0, 0, 0, 1, 1, 2], [0], [0]>} : vector<2x32x32xf32>, vector<2x32x128xf32>, vector<2x32x128xf32> -> vector<2x32x128xf32>
    "tpu.trace_stop"() : () -> ()
    %26 = arith.addf %23, %25 : vector<2x32x128xf32>
    %27 = tpu.iota {dimensions = array<i32: 2>} : vector<2x32x128xi32>
    %c8_i32 = arith.constant 8 : i32
    %28 = vector.broadcast %c8_i32 : i32 to vector<2x32x128xi32>
    %29 = arith.cmpi slt, %27, %28 : vector<2x32x128xi32>
    %cst_18 = arith.constant -1.000000e+30 : f32
    %30 = vector.broadcast %cst_18 : f32 to vector<2x32x128xf32>
    %31 = arith.select %29, %26, %30 : vector<2x32x128xi1>, vector<2x32x128xf32>
    %cst_19 = arith.constant dense<0xFF800000> : vector<2x32xf32>
    %32 = vector.multi_reduction <maximumf>, %31, %cst_19 [2] : vector<2x32x128xf32> to vector<2x32xf32>
    %33 = vector.shape_cast %32 : vector<2x32xf32> to vector<2x32x1xf32>
    %34 = vector.broadcast %33 : vector<2x32x1xf32> to vector<2x32x128xf32>
    %35 = arith.subf %31, %34 : vector<2x32x128xf32>
    %36 = math.exp %35 : vector<2x32x128xf32>
    %cst_20 = arith.constant dense<0.000000e+00> : vector<2x32xf32>
    %37 = vector.multi_reduction <add>, %36, %cst_20 [2] : vector<2x32x128xf32> to vector<2x32xf32>
    %38 = vector.shape_cast %37 : vector<2x32xf32> to vector<2x32x1xf32>
    %39 = math.log %38 : vector<2x32x1xf32>
    %40 = vector.broadcast %39 : vector<2x32x1xf32> to vector<2x32x128xf32>
    %41 = arith.subf %35, %40 : vector<2x32x128xf32>
    %42 = tpu.reciprocal %38 : vector<2x32x1xf32> -> vector<2x32x1xf32>
    %43 = vector.broadcast %42 : vector<2x32x1xf32> to vector<2x32x128xf32>
    %44 = arith.mulf %36, %43 : vector<2x32x128xf32>
    %c0_21 = arith.constant 0 : index
    %c0_22 = arith.constant 0 : index
    %c0_23 = arith.constant 0 : index
    %45 = vector.load %arg6[%c0_21, %c0_22, %c0_23] : memref<2x32x256xf32, #tpu.memory_space<vmem>>, vector<2x32x128xf32>
    tpu.vector_store %arg6[%c0_21, %c0_22, %c0_23], %44 {strides = array<i32>} : memref<2x32x256xf32, #tpu.memory_space<vmem>>, vector<2x32x128xf32>,
    %c0_24 = arith.constant 0 : index
    %c0_25 = arith.constant 0 : index
    %c128 = arith.constant 128 : index
    %46 = vector.load %arg6[%c0_24, %c0_25, %c128] : memref<2x32x256xf32, #tpu.memory_space<vmem>>, vector<2x32x128xf32>
    tpu.vector_store %arg6[%c0_24, %c0_25, %c128], %41 {strides = array<i32>} : memref<2x32x256xf32, #tpu.memory_space<vmem>>, vector<2x32x128xf32>,
    return
  }
  func.func @transform_0(%arg0: i32) -> (i32, i32, i32) {
    %c0_i32 = arith.constant 0 : i32
    %c0_i32_0 = arith.constant 0 : i32
    %c0_i32_1 = arith.constant 0 : i32
    return %arg0, %c0_i32, %c0_i32_0 : i32, i32, i32
  }
  func.func @transform_1(%arg0: i32) -> (i32, i32, i32) {
    %c0_i32 = arith.constant 0 : i32
    %c0_i32_0 = arith.constant 0 : i32
    %c0_i32_1 = arith.constant 0 : i32
    return %arg0, %c0_i32, %c0_i32_0 : i32, i32, i32
  }
  func.func @transform_2(%arg0: i32) -> (i32, i32, i32) {
    %c0_i32 = arith.constant 0 : i32
    %c0_i32_0 = arith.constant 0 : i32
    %c0_i32_1 = arith.constant 0 : i32
    return %arg0, %c0_i32, %c0_i32_0 : i32, i32, i32
  }
  func.func @transform_3(%arg0: i32) -> (i32, i32) {
    %c0_i32 = arith.constant 0 : i32
    %c0_i32_0 = arith.constant 0 : i32
    %c0_i32_1 = arith.constant 0 : i32
    return %c0_i32, %c0_i32_0 : i32, i32
  }
  func.func @transform_4(%arg0: i32) -> (i32, i32) {
    %c0_i32 = arith.constant 0 : i32
    %c0_i32_0 = arith.constant 0 : i32
    %c0_i32_1 = arith.constant 0 : i32
    return %c0_i32, %c0_i32_0 : i32, i32
  }
  func.func @transform_5(%arg0: i32) -> (i32, i32, i32) {
    %c0_i32 = arith.constant 0 : i32
    %c0_i32_0 = arith.constant 0 : i32
    %c0_i32_1 = arith.constant 0 : i32
    return %arg0, %c0_i32, %c0_i32_0 : i32, i32, i32
  }
}

</mosaic_0001>

<llo_original>
// kernel: group_gcn_forward_batched.1
$region0: #{group_gcn_forward_batched.1}
  #allocation0 [shape = 'u32[]', space=smem, size = 0x4, offset = 0x4, fixed_abs, tag = 'smem constant byte address 0x4 - core index']
  #allocation1 [shape = 'u32[144,128]{1,0:T(1,128)}', space=vmem, size = 0x12000, scoped, tag = 'internal scratch']
  %s0 = inlined_call_operand.vmem [shape: f32[4,32,16], index: 0, kind: input, shape index: {}]
  %s1 = inlined_call_operand.vmem [shape: f32[4,32,32], index: 1, kind: input, shape index: {}]
  %s2 = inlined_call_operand.vmem [shape: f32[4,32,32], index: 2, kind: input, shape index: {}]
  %s3 = inlined_call_operand.vmem [shape: f32[16,384], index: 3, kind: input, shape index: {}]
  %s4 = inlined_call_operand.vmem [shape: f32[128,384], index: 4, kind: input, shape index: {}]
  %s5 = inlined_call_operand.vmem [shape: f32[4,32,256], index: 5, kind: output, shape index: {}]
  %s6 = sld [smem:[#allocation0]]
  $region53: #{group_gcn_forward_batched.1} parent=0
    _
  %s8 = ssub.s32 1, %s6
  %s9 = scalar_select 0, %s8, %s6
  loop: start=0, step=1, limit=4
  $region2: #{group_gcn_forward_batched.1} parent=0 // loop_pre_header
    _
  $region3: #{group_gcn_forward_batched.1} parent=0 // loop_header
    %s11 = sphi 0, %s15
    %p12 = scmp.ge.s32.totalorder %s11, 4
    %s21 = sphi 0, %s23
    %s24 = sphi 0, %s21
    %s25 = sphi 0, %s24
    %s41 = sphi 0, %s25
    %s47 = sphi 0, %s49
    %s50 = sphi 0, %s47
    %s51 = sphi 0, %s50
    %s67 = sphi 0, %s51
    %s73 = sphi 0, %s75
    %s76 = sphi 0, %s73
    %s77 = sphi 0, %s76
    %s93 = sphi 0, %s77
    %s97 = sphi 0, %s97
    %s99 = sphi 0, %s97
    %s100 = sphi 0, %s99
    %s114 = sphi 0, %s100
    %s118 = sphi 0, %s118
    %s120 = sphi 0, %s118
    %s121 = sphi 0, %s120
    %s135 = sphi 0, %s121
    %s141 = sphi 0, %s143
    %s144 = sphi 0, %s141
    %s145 = sphi 0, %s144
    %s161 = sphi 0, %s145
  $region4: #{group_gcn_forward_batched.1} parent=0 // loop_header_branch
    %14 = sbr.rel (%p12) target = $region8
  $region5: #{group_gcn_forward_batched.1} parent=0 // loop_body
    %s16 = ssub.s32 %s11, 1
    %s17 = ssub.s32 %s11, 2
    %s18 = sadd.s32 %s11, 1
    %s19 = ssub.s32 %s11, %s18
    %p20 = scmp.eq.s32.totalorder %s19, 0
    %s22 = sadd.s32 %s21, 1
    %s23 = scalar_select %p20, %s21, %s22
    %p26 = pneg %p20
    %p27 = scmp.eq.s32.totalorder %s11, 1
    %p28 = por %p26, %p27
    %p29 = scmp.ne.s32.totalorder %s21, %s24
    %p30 = scmp.eq.s32.totalorder %s11, 0
    %p31 = por %p29, %p30
    %p32 = scmp.ne.s32.totalorder %s21, %s24
    %p33 = scmp.eq.s32.totalorder %s16, 1
    %p34 = por %p32, %p33
    %p35 = scmp.ne.s32.totalorder %s24, %s25
    %p36 = scmp.eq.s32.totalorder %s16, 0
    %p37 = por %p35, %p36
    %p38 = scmp.ne.s32.totalorder %s24, %s25
    %p39 = scmp.eq.s32.totalorder %s17, 1
    %p40 = por %p38, %p39
    %p42 = scmp.ne.s32.totalorder %s25, %s41
    %p43 = scmp.eq.s32.totalorder %s17, 0
    %p44 = por %p42, %p43
    %s45 = ssub.s32 %s11, %s18
    %p46 = scmp.eq.s32.totalorder %s45, 0
    %s48 = sadd.s32 %s47, 1
    %s49 = scalar_select %p46, %s47, %s48
    %p52 = pneg %p46
    %p53 = scmp.eq.s32.totalorder %s11, 1
    %p54 = por %p52, %p53
    %p55 = scmp.ne.s32.totalorder %s47, %s50
    %p56 = scmp.eq.s32.totalorder %s11, 0
    %p57 = por %p55, %p56
    %p58 = scmp.ne.s32.totalorder %s47, %s50
    %p59 = scmp.eq.s32.totalorder %s16, 1
    %p60 = por %p58, %p59
    %p61 = scmp.ne.s32.totalorder %s50, %s51
    %p62 = scmp.eq.s32.totalorder %s16, 0
    %p63 = por %p61, %p62
    %p64 = scmp.ne.s32.totalorder %s50, %s51
    %p65 = scmp.eq.s32.totalorder %s17, 1
    %p66 = por %p64, %p65
    %p68 = scmp.ne.s32.totalorder %s51, %s67
    %p69 = scmp.eq.s32.totalorder %s17, 0
    %p70 = por %p68, %p69
    %s71 = ssub.s32 %s11, %s18
    %p72 = scmp.eq.s32.totalorder %s71, 0
    %s74 = sadd.s32 %s73, 1
    %s75 = scalar_select %p72, %s73, %s74
    %p78 = pneg %p72
    %p79 = scmp.eq.s32.totalorder %s11, 1
    %p80 = por %p78, %p79
    %p81 = scmp.ne.s32.totalorder %s73, %s76
    %p82 = scmp.eq.s32.totalorder %s11, 0
    %p83 = por %p81, %p82
    %p84 = scmp.ne.s32.totalorder %s73, %s76
    %p85 = scmp.eq.s32.totalorder %s16, 1
    %p86 = por %p84, %p85
    %p87 = scmp.ne.s32.totalorder %s76, %s77
    %p88 = scmp.eq.s32.totalorder %s16, 0
    %p89 = por %p87, %p88
    %p90 = scmp.ne.s32.totalorder %s76, %s77
    %p91 = scmp.eq.s32.totalorder %s17, 1
    %p92 = por %p90, %p91
    %p94 = scmp.ne.s32.totalorder %s77, %s93
    %p95 = scmp.eq.s32.totalorder %s17, 0
    %p96 = por %p94, %p95
    %s98 = sadd.s32 %s97, 1
    %p101 = scmp.eq.s32.totalorder %s11, 1
    %p102 = scmp.ne.s32.totalorder %s97, %s99
    %p103 = scmp.eq.s32.totalorder %s11, 0
    %p104 = por %p102, %p103
    %p105 = scmp.ne.s32.totalorder %s97, %s99
    %p106 = scmp.eq.s32.totalorder %s16, 1
    %p107 = por %p105, %p106
    %p108 = scmp.ne.s32.totalorder %s99, %s100
    %p109 = scmp.eq.s32.totalorder %s16, 0
    %p110 = por %p108, %p109
    %p111 = scmp.ne.s32.totalorder %s99, %s100
    %p112 = scmp.eq.s32.totalorder %s17, 1
    %p113 = por %p111, %p112
    %p115 = scmp.ne.s32.totalorder %s100, %s114
    %p116 = scmp.eq.s32.totalorder %s17, 0
    %p117 = por %p115, %p116
    %s119 = sadd.s32 %s118, 1
    %p122 = scmp.eq.s32.totalorder %s11, 1
    %p123 = scmp.ne.s32.totalorder %s118, %s120
    %p124 = scmp.eq.s32.totalorder %s11, 0
    %p125 = por %p123, %p124
    %p126 = scmp.ne.s32.totalorder %s118, %s120
    %p127 = scmp.eq.s32.totalorder %s16, 1
    %p128 = por %p126, %p127
    %p129 = scmp.ne.s32.totalorder %s120, %s121
    %p130 = scmp.eq.s32.totalorder %s16, 0
    %p131 = por %p129, %p130
    %p132 = scmp.ne.s32.totalorder %s120, %s121
    %p133 = scmp.eq.s32.totalorder %s17, 1
    %p134 = por %p132, %p133
    %p136 = scmp.ne.s32.totalorder %s121, %s135
    %p137 = scmp.eq.s32.totalorder %s17, 0
    %p138 = por %p136, %p137
    %s139 = ssub.s32 %s11, %s18
    %p140 = scmp.eq.s32.totalorder %s139, 0
    %s142 = sadd.s32 %s141, 1
    %s143 = scalar_select %p140, %s141, %s142
    %p146 = pneg %p140
    %p147 = scmp.eq.s32.totalorder %s11, 1
    %p148 = por %p146, %p147
    %p149 = scmp.ne.s32.totalorder %s141, %s144
    %p150 = scmp.eq.s32.totalorder %s11, 0
    %p151 = por %p149, %p150
    %p152 = scmp.ne.s32.totalorder %s141, %s144
    %p153 = scmp.eq.s32.totalorder %s16, 1
    %p154 = por %p152, %p153
    %p155 = scmp.ne.s32.totalorder %s144, %s145
    %p156 = scmp.eq.s32.totalorder %s16, 0
    %p157 = por %p155, %p156
    %p158 = scmp.ne.s32.totalorder %s144, %s145
    %p159 = scmp.eq.s32.totalorder %s17, 1
    %p160 = por %p158, %p159
    %p162 = scmp.ne.s32.totalorder %s145, %s161
    %p163 = scmp.eq.s32.totalorder %s17, 0
    %p164 = por %p162, %p163
    %p165 = scmp.le.s32.totalorder 1, %s11
    %p166 = scmp.lt.s32.totalorder %s11, 3
    %p167 = pnand %p165, %p166
    %p168 = pneg %p167
    // Predicated region
    $region9: #{group_gcn_forward_batched.1} parent=5 // pred_check
      _
    $region10: #{group_gcn_forward_batched.1} parent=5 // pred_check_branch
      %170 = sbr.rel (%p167) target = $region12
    $region11: #{group_gcn_forward_batched.1} parent=5 // pred_region
      %s171 = ssub.s32 %s11, 1
      // Predicated region
      $region13: #{group_gcn_forward_batched.1} parent=11 // pred_check
        %p172 = pneg %p110
      $region14: #{group_gcn_forward_batched.1} parent=11 // pred_check_branch
        %174 = sbr.rel (%p172) target = $region16
      $region15: #{group_gcn_forward_batched.1} parent=11 // pred_region
        _
      $region16: #{group_gcn_forward_batched.1} parent=11 // pred_fallthru
        _
      // Predicated region
      $region17: #{group_gcn_forward_batched.1} parent=11 // pred_check
        %p175 = pneg %p131
      $region18: #{group_gcn_forward_batched.1} parent=11 // pred_check_branch
        %177 = sbr.rel (%p175) target = $region20
      $region19: #{group_gcn_forward_batched.1} parent=11 // pred_region
        _
      $region20: #{group_gcn_forward_batched.1} parent=11 // pred_fallthru
        _
    $region12: #{group_gcn_forward_batched.1} parent=5 // pred_fallthru
      _
    %p178 = scmp.lt.s32.totalorder %s11, 2
    // Predicated region
    $region21: #{group_gcn_forward_batched.1} parent=5 // pred_check
      %p179 = pneg %p178
    $region22: #{group_gcn_forward_batched.1} parent=5 // pred_check_branch
      %181 = sbr.rel (%p179) target = $region24
    $region23: #{group_gcn_forward_batched.1} parent=5 // pred_region
      // Predicated region
      $region25: #{group_gcn_forward_batched.1} parent=23 // pred_check
        %p182 = pneg %p31
      $region26: #{group_gcn_forward_batched.1} parent=23 // pred_check_branch
        %184 = sbr.rel (%p182) target = $region28
      $region27: #{group_gcn_forward_batched.1} parent=23 // pred_region
        %s185 = smul.u32 2, %s11
        %p186 = scmp.lt.s32.totalorder %s185, 3
        %s187 = scalar_select %p186, %s185, 3
        %s188 = smul.addr %s187, 4
        %s189 = smul.addr %s188, 8
        %s190 = scalar_lea.vmem %s0, %s189
        %s191 = smul.u32 2, %s11
      $region28: #{group_gcn_forward_batched.1} parent=23 // pred_fallthru
        _
      // Predicated region
      $region29: #{group_gcn_forward_batched.1} parent=23 // pred_check
        %p192 = pneg %p57
      $region30: #{group_gcn_forward_batched.1} parent=23 // pred_check_branch
        %194 = sbr.rel (%p192) target = $region32
      $region31: #{group_gcn_forward_batched.1} parent=23 // pred_region
        %s195 = smul.u32 2, %s11
        %p196 = scmp.lt.s32.totalorder %s195, 3
        %s197 = scalar_select %p196, %s195, 3
        %s198 = smul.addr %s197, 4
        %s199 = smul.addr %s198, 8
        %s200 = scalar_lea.vmem %s1, %s199
        %s201 = smul.u32 2, %s11
      $region32: #{group_gcn_forward_batched.1} parent=23 // pred_fallthru
        _
      // Predicated region
      $region33: #{group_gcn_forward_batched.1} parent=23 // pred_check
        %p202 = pneg %p83
      $region34: #{group_gcn_forward_batched.1} parent=23 // pred_check_branch
        %204 = sbr.rel (%p202) target = $region36
      $region35: #{group_gcn_forward_batched.1} parent=23 // pred_region
        %s205 = smul.u32 2, %s11
        %p206 = scmp.lt.s32.totalorder %s205, 3
        %s207 = scalar_select %p206, %s205, 3
        %s208 = smul.addr %s207, 4
        %s209 = smul.addr %s208, 8
        %s210 = scalar_lea.vmem %s2, %s209
        %s211 = smul.u32 2, %s11
      $region36: #{group_gcn_forward_batched.1} parent=23 // pred_fallthru
        _
    $region24: #{group_gcn_forward_batched.1} parent=5 // pred_fallthru
      _
    %p212 = scmp.le.s32.totalorder 1, %s11
    %p213 = scmp.lt.s32.totalorder %s11, 3
    %p214 = pnand %p212, %p213
    %p215 = pneg %p214
    // Predicated region
    $region37: #{group_gcn_forward_batched.1} parent=5 // pred_check
      _
    $region38: #{group_gcn_forward_batched.1} parent=5 // pred_check_branch
      %217 = sbr.rel (%p214) target = $region40
    $region39: #{group_gcn_forward_batched.1} parent=5 // pred_region
      %s218 = ssub.s32 %s11, 1
      %s219 = smul.u32 2, %s16
      %p220 = scmp.lt.s32.totalorder %s219, 3
      %s221 = scalar_select %p220, %s219, 3
      %s222 = smul.addr %s221, 4
      %s223 = smul.addr %s222, 8
      %s224 = scalar_lea.vmem %s0, %s223
      %p225 = pneg %p37
      %p226 = pneg %p34
      %s227 = smul.u32 2, %s16
      %p228 = scmp.lt.s32.totalorder %s227, 3
      %s229 = scalar_select %p228, %s227, 3
      %s230 = smul.addr %s229, 4
      %s231 = smul.addr %s230, 8
      %s232 = scalar_lea.vmem %s1, %s231
      %p233 = pneg %p63
      %p234 = pneg %p60
      %s235 = smul.u32 2, %s16
      %p236 = scmp.lt.s32.totalorder %s235, 3
      %s237 = scalar_select %p236, %s235, 3
      %s238 = smul.addr %s237, 4
      %s239 = smul.addr %s238, 8
      %s240 = scalar_lea.vmem %s2, %s239
      %p241 = pneg %p89
      %p242 = pneg %p86
      %p243 = pneg %p110
      %p244 = pneg %p107
      %p245 = pneg %p131
      %p246 = pneg %p128
      %p247 = pneg %p157
      %p248 = pneg %p154
      %s249 = smul.u32 2, %s16
      %p250 = scmp.lt.s32.totalorder %s249, 3
      %s251 = scalar_select %p250, %s249, 3
      %s252 = smul.addr %s251, 8
      %s253 = smul.addr %s252, 8
      %s254 = scalar_lea.vmem %s5, %s253
      %s255 = smul.u32 2, %s16
      %p256 = scmp.lt.s32.totalorder %s255, 3
      %s257 = scalar_select %p256, %s255, 3
      %s258 = smul.addr %s257, 4
      %s259 = smul.addr %s258, 8
      %s260 = scalar_lea.vmem %s0, %s259
      %s261 = smul.u32 2, %s16
      %s262 = smul.u32 2, %s16
      %p263 = scmp.lt.s32.totalorder %s262, 3
      %s264 = scalar_select %p263, %s262, 3
      %s265 = smul.addr %s264, 4
      %s266 = smul.addr %s265, 8
      %s267 = scalar_lea.vmem %s1, %s266
      %s268 = smul.u32 2, %s16
      %s269 = smul.u32 2, %s16
      %p270 = scmp.lt.s32.totalorder %s269, 3
      %s271 = scalar_select %p270, %s269, 3
      %s272 = smul.addr %s271, 4
      %s273 = smul.addr %s272, 8
      %s274 = scalar_lea.vmem %s2, %s273
      %s275 = smul.u32 2, %s16
      %s276 = smul.u32 2, %s16
      %p277 = scmp.lt.s32.totalorder %s276, 3
      %s278 = scalar_select %p277, %s276, 3
      %s279 = smul.addr %s278, 8
      %s280 = smul.addr %s279, 8
      %s281 = scalar_lea.vmem %s5, %s280
      %s282 = smul.u32 2, %s16
      %v283 = vld [vmem:[%s3] sm:$0xff]
      %v284 = vld [vmem:[%s3 + $0x8] sm:$0xff]
      %v285 = vld [vmem:[%s3 + $0x10] sm:$0xff]
      %v286 = vld [vmem:[%s3 + $0x18] sm:$0xff]
      %v287 = vld [vmem:[%s3 + $0x20] sm:$0xff]
      %v288 = vld [vmem:[%s3 + $0x28] sm:$0xff]
      %v289 = vld [vmem:[%s4] sm:$0xff]
      %v290 = vld [vmem:[%s4 + $0x8] sm:$0xff]
      %v291 = vld [vmem:[%s4 + $0x10] sm:$0xff]
      %v292 = vld [vmem:[%s4 + $0x18] sm:$0xff]
      %v293 = vld [vmem:[%s4 + $0x20] sm:$0xff]
      %v294 = vld [vmem:[%s4 + $0x28] sm:$0xff]
      %v295 = vld [vmem:[%s4 + $0x30] sm:$0xff]
      %v296 = vld [vmem:[%s4 + $0x38] sm:$0xff]
      %v297 = vld [vmem:[%s4 + $0x40] sm:$0xff]
      %v298 = vld [vmem:[%s4 + $0x48] sm:$0xff]
      %v299 = vld [vmem:[%s4 + $0x50] sm:$0xff]
      %v300 = vld [vmem:[%s4 + $0x58] sm:$0xff]
      %v301 = vld [vmem:[%s4 + $0x60] sm:$0xff]
      %v302 = vld [vmem:[%s4 + $0x68] sm:$0xff]
      %v303 = vld [vmem:[%s4 + $0x70] sm:$0xff]
      %v304 = vld [vmem:[%s4 + $0x78] sm:$0xff]
      %v305 = vld [vmem:[%s4 + $0x80] sm:$0xff]
      %v306 = vld [vmem:[%s4 + $0x88] sm:$0xff]
      %v307 = vld [vmem:[%s4 + $0x90] sm:$0xff]
      %v308 = vld [vmem:[%s4 + $0x98] sm:$0xff]
      %v309 = vld [vmem:[%s4 + $0xa0] sm:$0xff]
      %v310 = vld [vmem:[%s4 + $0xa8] sm:$0xff]
      %v311 = vld [vmem:[%s4 + $0xb0] sm:$0xff]
      %v312 = vld [vmem:[%s4 + $0xb8] sm:$0xff]
      %v313 = vld [vmem:[%s4 + $0xc0] sm:$0xff]
      %v314 = vld [vmem:[%s4 + $0xc8] sm:$0xff]
      %v315 = vld [vmem:[%s4 + $0xd0] sm:$0xff]
      %v316 = vld [vmem:[%s4 + $0xd8] sm:$0xff]
      %v317 = vld [vmem:[%s4 + $0xe0] sm:$0xff]
      %v318 = vld [vmem:[%s4 + $0xe8] sm:$0xff]
      %v319 = vld [vmem:[%s4 + $0xf0] sm:$0xff]
      %v320 = vld [vmem:[%s4 + $0xf8] sm:$0xff]
      %v321 = vld [vmem:[%s4 + $0x100] sm:$0xff]
      %v322 = vld [vmem:[%s4 + $0x108] sm:$0xff]
      %v323 = vld [vmem:[%s4 + $0x110] sm:$0xff]
      %v324 = vld [vmem:[%s4 + $0x118] sm:$0xff]
      %v325 = vld [vmem:[%s4 + $0x120] sm:$0xff]
      %v326 = vld [vmem:[%s4 + $0x128] sm:$0xff]
      %v327 = vld [vmem:[%s4 + $0x130] sm:$0xff]
      %v328 = vld [vmem:[%s4 + $0x138] sm:$0xff]
      %v329 = vld [vmem:[%s4 + $0x140] sm:$0xff]
      %v330 = vld [vmem:[%s4 + $0x148] sm:$0xff]
      %v331 = vld [vmem:[%s4 + $0x150] sm:$0xff]
      %v332 = vld [vmem:[%s4 + $0x158] sm:$0xff]
      %v333 = vld [vmem:[%s4 + $0x160] sm:$0xff]
      %v334 = vld [vmem:[%s4 + $0x168] sm:$0xff]
      %v335 = vld [vmem:[%s4 + $0x170] sm:$0xff]
      %v336 = vld [vmem:[%s4 + $0x178] sm:$0xff]
      %v337 = vld [vmem:[%s267] sm:$0xff]
      %v338 = vld [vmem:[%s267 + $0x8] sm:$0xff]
      %v339 = vld [vmem:[%s267 + $0x10] sm:$0xff]
      %v340 = vld [vmem:[%s267 + $0x18] sm:$0xff]
      %v341 = vld [vmem:[%s267 + $0x20] sm:$0xff]
      %v342 = vld [vmem:[%s267 + $0x28] sm:$0xff]
      %v343 = vld [vmem:[%s267 + $0x30] sm:$0xff]
      %v344 = vld [vmem:[%s267 + $0x38] sm:$0xff]
      %v345 = vld [vmem:[%s274] sm:$0xff]
      %v346 = vld [vmem:[%s274 + $0x8] sm:$0xff]
      %v347 = vld [vmem:[%s274 + $0x10] sm:$0xff]
      %v348 = vld [vmem:[%s274 + $0x18] sm:$0xff]
      %v349 = vld [vmem:[%s274 + $0x20] sm:$0xff]
      %v350 = vld [vmem:[%s274 + $0x28] sm:$0xff]
      %v351 = vld [vmem:[%s274 + $0x30] sm:$0xff]
      %v352 = vld [vmem:[%s274 + $0x38] sm:$0xff]
      %v353 = vld [vmem:[%s260] sm:$0xff]
      %v354 = vld [vmem:[%s260 + $0x8] sm:$0xff]
      %v355 = vld [vmem:[%s260 + $0x10] sm:$0xff]
      %v356 = vld [vmem:[%s260 + $0x18] sm:$0xff]
      %v357 = vld [vmem:[%s260 + $0x20] sm:$0xff]
      %v358 = vld [vmem:[%s260 + $0x28] sm:$0xff]
      %v359 = vld [vmem:[%s260 + $0x30] sm:$0xff]
      %v360 = vld [vmem:[%s260 + $0x38] sm:$0xff]
      %vm361 = vcmask 130048
      %v363 = vsel %vm361, %v353, 0
      %v366 = vsel %vm361, %v354, 0
      %v369 = vsel %vm361, %v355, 0
      %v372 = vsel %vm361, %v356, 0
      %v375 = vsel %vm361, %v357, 0
      %v378 = vsel %vm361, %v358, 0
      %v381 = vsel %vm361, %v359, 0
      %v384 = vsel %vm361, %v360, 0
      %386 = vmatprep.subr.mxu0 0.0
      %387 = vmatpush1.msra.mxu0 0.0
      %388 = vmatprep.subr.mxu0 0.0
      %389 = vmatpush1.msra.mxu0 0.0
      %390 = vmatprep.subr.mxu0 0.0
      %391 = vmatpush1.msra.mxu0 0.0
      %392 = vmatprep.subr.mxu0 0.0
      %393 = vmatpush1.msra.mxu0 0.0
      %394 = vmatprep.subr.mxu0 0.0
      %395 = vmatpush1.msra.mxu0 0.0
      %396 = vmatprep.subr.mxu0 0.0
      %397 = vmatpush1.msra.mxu0 0.0
      %398 = vmatprep.subr.mxu0 0.0
      %399 = vmatpush1.msra.mxu0 0.0
      %400 = vmatprep.subr.mxu0 0.0
      %401 = vmatpush1.msra.mxu0 0.0
      %402 = vmatprep.subr.mxu0 0.0
      %403 = vmatpush1.msra.mxu0 0.0
      %404 = vmatprep.subr.mxu0 0.0
      %405 = vmatpush1.msra.mxu0 0.0
      %406 = vmatprep.subr.mxu0 0.0
      %407 = vmatpush1.msra.mxu0 0.0
      %408 = vmatprep.subr.mxu0 0.0
      %409 = vmatpush1.msra.mxu0 0.0
      %410 = vmatprep.subr.mxu0 0.0
      %411 = vmatpush1.msra.mxu0 0.0
      %412 = vmatprep.subr.mxu0 0.0
      %413 = vmatpush1.msra.mxu0 0.0
      %414 = vmatprep.subr.mxu0 %v287
      %415 = vmatpush1.msra.mxu0 %v286
      %416 = vmatprep.subr.mxu0 %v284
      %417 = vmatpush1.msra.mxu0 %v283
      %418 = vmatprep.subr.mxu0 0.0
      %419 = vmatpush2.msra.mxu0 0.0
      %420 = vmatprep.subr.mxu0 0.0
      %421 = vmatpush2.msra.mxu0 0.0
      %422 = vmatprep.subr.mxu0 0.0
      %423 = vmatpush2.msra.mxu0 0.0
      %424 = vmatprep.subr.mxu0 0.0
      %425 = vmatpush2.msra.mxu0 0.0
      %426 = vmatprep.subr.mxu0 0.0
      %427 = vmatpush2.msra.mxu0 0.0
      %428 = vmatprep.subr.mxu0 0.0
      %429 = vmatpush2.msra.mxu0 0.0
      %430 = vmatprep.subr.mxu0 0.0
      %431 = vmatpush2.msra.mxu0 0.0
      %432 = vmatprep.subr.mxu0 0.0
      %433 = vmatpush2.msra.mxu0 0.0
      %434 = vmatprep.subr.mxu0 0.0
      %435 = vmatpush2.msra.mxu0 0.0
      %436 = vmatprep.subr.mxu0 0.0
      %437 = vmatpush2.msra.mxu0 0.0
      %438 = vmatprep.subr.mxu0 0.0
      %439 = vmatpush2.msra.mxu0 0.0
      %440 = vmatprep.subr.mxu0 0.0
      %441 = vmatpush2.msra.mxu0 0.0
      %442 = vmatprep.subr.mxu0 0.0
      %443 = vmatpush2.msra.mxu0 0.0
      %444 = vmatprep.subr.mxu0 0.0
      %445 = vmatpush2.msra.mxu0 0.0
      %446 = vmatprep.subr.mxu0 0.0
      %447 = vmatpush2.msra.mxu0 0.0
      %448 = vmatprep.subr.mxu0 0.0
      %449 = vmatpush2.msra.mxu0 0.0
      %450 = vmatprep.mubr.f32.mxu0 0.0
      %451 = vmatmul.mubr.f32.gmra.mxu0 %v363
      %v452 = vpop.f32.mrf.mxu0
      %v453 = vadd.f32 0.0, %v452
      %v454 = vpop.f32.mrf.mxu0
      %v455 = vadd.f32 0.0, %v454
      %456 = vmatprep.mubr.f32.mxu0 0.0
      %457 = vmatmul.mubr.f32.gmra.mxu0 %v366
      %v458 = vpop.f32.mrf.mxu0
      %v459 = vadd.f32 0.0, %v458
      %v460 = vpop.f32.mrf.mxu0
      %v461 = vadd.f32 0.0, %v460
      %462 = vmatprep.mubr.f32.mxu0 0.0
      %463 = vmatmul.mubr.f32.gmra.mxu0 %v369
      %v464 = vpop.f32.mrf.mxu0
      %v465 = vadd.f32 0.0, %v464
      %v466 = vpop.f32.mrf.mxu0
      %v467 = vadd.f32 0.0, %v466
      %468 = vmatprep.mubr.f32.mxu0 0.0
      %469 = vmatmul.mubr.f32.gmra.mxu0 %v372
      %v470 = vpop.f32.mrf.mxu0
      %v471 = vadd.f32 0.0, %v470
      %v472 = vpop.f32.mrf.mxu0
      %v473 = vadd.f32 0.0, %v472
      %474 = vmatprep.mubr.f32.mxu0 0.0
      %475 = vmatmul.mubr.f32.gmra.mxu0 %v375
      %v476 = vpop.f32.mrf.mxu0
      %v477 = vadd.f32 0.0, %v476
      %v478 = vpop.f32.mrf.mxu0
      %v479 = vadd.f32 0.0, %v478
      %480 = vmatprep.mubr.f32.mxu0 0.0
      %481 = vmatmul.mubr.f32.gmra.mxu0 %v378
      %v482 = vpop.f32.mrf.mxu0
      %v483 = vadd.f32 0.0, %v482
      %v484 = vpop.f32.mrf.mxu0
      %v485 = vadd.f32 0.0, %v484
      %486 = vmatprep.mubr.f32.mxu0 0.0
      %487 = vmatmul.mubr.f32.gmra.mxu0 %v381
      %v488 = vpop.f32.mrf.mxu0
      %v489 = vadd.f32 0.0, %v488
      %v490 = vpop.f32.mrf.mxu0
      %v491 = vadd.f32 0.0, %v490
      %492 = vmatprep.mubr.f32.mxu0 0.0
      %493 = vmatmul.mubr.f32.gmra.mxu0 %v384
      %v494 = vpop.f32.mrf.mxu0
      %v495 = vadd.f32 0.0, %v494
      %v496 = vpop.f32.mrf.mxu0
      %v497 = vadd.f32 0.0, %v496
      %498 = vdwg.mxu0
      %499 = vmatprep.subr.mxu0 0.0
      %500 = vmatpush1.msra.mxu0 0.0
      %501 = vmatprep.subr.mxu0 0.0
      %502 = vmatpush1.msra.mxu0 0.0
      %503 = vmatprep.subr.mxu0 0.0
      %504 = vmatpush1.msra.mxu0 0.0
      %505 = vmatprep.subr.mxu0 0.0
      %506 = vmatpush1.msra.mxu0 0.0
      %507 = vmatprep.subr.mxu0 0.0
      %508 = vmatpush1.msra.mxu0 0.0
      %509 = vmatprep.subr.mxu0 0.0
      %510 = vmatpush1.msra.mxu0 0.0
      %511 = vmatprep.subr.mxu0 0.0
      %512 = vmatpush1.msra.mxu0 0.0
      %513 = vmatprep.subr.mxu0 0.0
      %514 = vmatpush1.msra.mxu0 0.0
      %515 = vmatprep.subr.mxu0 0.0
      %516 = vmatpush1.msra.mxu0 0.0
      %517 = vmatprep.subr.mxu0 0.0
      %518 = vmatpush1.msra.mxu0 0.0
      %519 = vmatprep.subr.mxu0 0.0
      %520 = vmatpush1.msra.mxu0 0.0
      %521 = vmatprep.subr.mxu0 0.0
      %522 = vmatpush1.msra.mxu0 0.0
      %523 = vmatprep.subr.mxu0 0.0
      %524 = vmatpush1.msra.mxu0 0.0
      %525 = vmatprep.subr.mxu0 0.0
      %526 = vmatpush1.msra.mxu0 0.0
      %527 = vmatprep.subr.mxu0 0.0
      %528 = vmatpush1.msra.mxu0 %v288
      %529 = vmatprep.subr.mxu0 0.0
      %530 = vmatpush1.msra.mxu0 %v285
      %531 = vmatprep.subr.mxu0 0.0
      %532 = vmatpush2.msra.mxu0 0.0
      %533 = vmatprep.subr.mxu0 0.0
      %534 = vmatpush2.msra.mxu0 0.0
      %535 = vmatprep.subr.mxu0 0.0
      %536 = vmatpush2.msra.mxu0 0.0
      %537 = vmatprep.subr.mxu0 0.0
      %538 = vmatpush2.msra.mxu0 0.0
      %539 = vmatprep.subr.mxu0 0.0
      %540 = vmatpush2.msra.mxu0 0.0
      %541 = vmatprep.subr.mxu0 0.0
      %542 = vmatpush2.msra.mxu0 0.0
      %543 = vmatprep.subr.mxu0 0.0
      %544 = vmatpush2.msra.mxu0 0.0
      %545 = vmatprep.subr.mxu0 0.0
      %546 = vmatpush2.msra.mxu0 0.0
      %547 = vmatprep.subr.mxu0 0.0
      %548 = vmatpush2.msra.mxu0 0.0
      %549 = vmatprep.subr.mxu0 0.0
      %550 = vmatpush2.msra.mxu0 0.0
      %551 = vmatprep.subr.mxu0 0.0
      %552 = vmatpush2.msra.mxu0 0.0
      %553 = vmatprep.subr.mxu0 0.0
      %554 = vmatpush2.msra.mxu0 0.0
      %555 = vmatprep.subr.mxu0 0.0
      %556 = vmatpush2.msra.mxu0 0.0
      %557 = vmatprep.subr.mxu0 0.0
      %558 = vmatpush2.msra.mxu0 0.0
      %559 = vmatprep.subr.mxu0 0.0
      %560 = vmatpush2.msra.mxu0 0.0
      %561 = vmatprep.subr.mxu0 0.0
      %562 = vmatpush2.msra.mxu0 0.0
      %563 = vmatprep.mubr.f32.mxu0 0.0
      %564 = vmatmul.mubr.f32.gmra.mxu0 %v363
      %v565 = vpop.f32.mrf.mxu0
      %v566 = vadd.f32 0.0, %v565
      %v567 = vpop.f32.mrf.mxu0
      %568 = vmatprep.mubr.f32.mxu0 0.0
      %569 = vmatmul.mubr.f32.gmra.mxu0 %v366
      %v570 = vpop.f32.mrf.mxu0
      %v571 = vadd.f32 0.0, %v570
      %v572 = vpop.f32.mrf.mxu0
      %573 = vmatprep.mubr.f32.mxu0 0.0
      %574 = vmatmul.mubr.f32.gmra.mxu0 %v369
      %v575 = vpop.f32.mrf.mxu0
      %v576 = vadd.f32 0.0, %v575
      %v577 = vpop.f32.mrf.mxu0
      %578 = vmatprep.mubr.f32.mxu0 0.0
      %579 = vmatmul.mubr.f32.gmra.mxu0 %v372
      %v580 = vpop.f32.mrf.mxu0
      %v581 = vadd.f32 0.0, %v580
      %v582 = vpop.f32.mrf.mxu0
      %583 = vmatprep.mubr.f32.mxu0 0.0
      %584 = vmatmul.mubr.f32.gmra.mxu0 %v375
      %v585 = vpop.f32.mrf.mxu0
      %v586 = vadd.f32 0.0, %v585
      %v587 = vpop.f32.mrf.mxu0
      %588 = vmatprep.mubr.f32.mxu0 0.0
      %589 = vmatmul.mubr.f32.gmra.mxu0 %v378
      %v590 = vpop.f32.mrf.mxu0
      %v591 = vadd.f32 0.0, %v590
      %v592 = vpop.f32.mrf.mxu0
      %593 = vmatprep.mubr.f32.mxu0 0.0
      %594 = vmatmul.mubr.f32.gmra.mxu0 %v381
      %v595 = vpop.f32.mrf.mxu0
      %v596 = vadd.f32 0.0, %v595
      %v597 = vpop.f32.mrf.mxu0
      %598 = vmatprep.mubr.f32.mxu0 0.0
      %599 = vmatmul.mubr.f32.gmra.mxu0 %v384
      %v600 = vpop.f32.mrf.mxu0
      %v601 = vadd.f32 0.0, %v600
      %v602 = vpop.f32.mrf.mxu0
      %603 = vdwg.mxu0
      %vm604 = vcmask 261120
      %v606 = vsel %vm604, %v337, 0
      %v609 = vsel %vm604, %v338, 0
      %v612 = vsel %vm604, %v339, 0
      %v615 = vsel %vm604, %v340, 0
      %617 = vmatprep.subr.mxu0 0.0
      %618 = vmatpush1.msra.mxu0 0.0
      %619 = vmatprep.subr.mxu0 0.0
      %620 = vmatpush1.msra.mxu0 0.0
      %621 = vmatprep.subr.mxu0 0.0
      %622 = vmatpush1.msra.mxu0 0.0
      %623 = vmatprep.subr.mxu0 0.0
      %624 = vmatpush1.msra.mxu0 0.0
      %625 = vmatprep.subr.mxu0 0.0
      %626 = vmatpush1.msra.mxu0 0.0
      %627 = vmatprep.subr.mxu0 0.0
      %628 = vmatpush1.msra.mxu0 0.0
      %629 = vmatprep.subr.mxu0 0.0
      %630 = vmatpush1.msra.mxu0 0.0
      %631 = vmatprep.subr.mxu0 0.0
      %632 = vmatpush1.msra.mxu0 0.0
      %633 = vmatprep.subr.mxu0 0.0
      %634 = vmatpush1.msra.mxu0 0.0
      %635 = vmatprep.subr.mxu0 0.0
      %636 = vmatpush1.msra.mxu0 0.0
      %637 = vmatprep.subr.mxu0 0.0
      %638 = vmatpush1.msra.mxu0 0.0
      %639 = vmatprep.subr.mxu0 0.0
      %640 = vmatpush1.msra.mxu0 0.0
      %641 = vmatprep.subr.mxu0 0.0
      %642 = vmatpush1.msra.mxu0 %v473
      %643 = vmatprep.subr.mxu0 0.0
      %644 = vmatpush1.msra.mxu0 %v467
      %645 = vmatprep.subr.mxu0 0.0
      %646 = vmatpush1.msra.mxu0 %v461
      %647 = vmatprep.subr.mxu0 0.0
      %648 = vmatpush1.msra.mxu0 %v455
      %649 = vmatprep.subr.mxu0 0.0
      %650 = vmatpush2.msra.mxu0 0.0
      %651 = vmatprep.subr.mxu0 0.0
      %652 = vmatpush2.msra.mxu0 0.0
      %653 = vmatprep.subr.mxu0 0.0
      %654 = vmatpush2.msra.mxu0 0.0
      %655 = vmatprep.subr.mxu0 0.0
      %656 = vmatpush2.msra.mxu0 0.0
      %657 = vmatprep.subr.mxu0 0.0
      %658 = vmatpush2.msra.mxu0 0.0
      %659 = vmatprep.subr.mxu0 0.0
      %660 = vmatpush2.msra.mxu0 0.0
      %661 = vmatprep.subr.mxu0 0.0
      %662 = vmatpush2.msra.mxu0 0.0
      %663 = vmatprep.subr.mxu0 0.0
      %664 = vmatpush2.msra.mxu0 0.0
      %665 = vmatprep.subr.mxu0 0.0
      %666 = vmatpush2.msra.mxu0 0.0
      %667 = vmatprep.subr.mxu0 0.0
      %668 = vmatpush2.msra.mxu0 0.0
      %669 = vmatprep.subr.mxu0 0.0
      %670 = vmatpush2.msra.mxu0 0.0
      %671 = vmatprep.subr.mxu0 0.0
      %672 = vmatpush2.msra.mxu0 0.0
      %673 = vmatprep.subr.mxu0 0.0
      %674 = vmatpush2.msra.mxu0 0.0
      %675 = vmatprep.subr.mxu0 0.0
      %676 = vmatpush2.msra.mxu0 0.0
      %677 = vmatprep.subr.mxu0 0.0
      %678 = vmatpush2.msra.mxu0 0.0
      %679 = vmatprep.subr.mxu0 0.0
      %680 = vmatpush2.msra.mxu0 0.0
      %681 = vmatprep.mubr.f32.mxu0 0.0
      %682 = vmatmul.mubr.f32.gmra.mxu0 %v606
      %v683 = vpop.f32.mrf.mxu0
      %v684 = vadd.f32 0.0, %v683
      %v685 = vpop.f32.mrf.mxu0
      %686 = vmatprep.mubr.f32.mxu0 0.0
      %687 = vmatmul.mubr.f32.gmra.mxu0 %v609
      %v688 = vpop.f32.mrf.mxu0
      %v689 = vadd.f32 0.0, %v688
      %v690 = vpop.f32.mrf.mxu0
      %691 = vmatprep.mubr.f32.mxu0 0.0
      %692 = vmatmul.mubr.f32.gmra.mxu0 %v612
      %v693 = vpop.f32.mrf.mxu0
      %v694 = vadd.f32 0.0, %v693
      %v695 = vpop.f32.mrf.mxu0
      %696 = vmatprep.mubr.f32.mxu0 0.0
      %697 = vmatmul.mubr.f32.gmra.mxu0 %v615
      %v698 = vpop.f32.mrf.mxu0
      %v699 = vadd.f32 0.0, %v698
      %v700 = vpop.f32.mrf.mxu0
      %701 = vdwg.mxu0
      %v703 = vsel %vm604, %v341, 0
      %v706 = vsel %vm604, %v342, 0
      %v709 = vsel %vm604, %v343, 0
      %v712 = vsel %vm604, %v344, 0
      %714 = vmatprep.subr.mxu0 0.0
      %715 = vmatpush1.msra.mxu0 0.0
      %716 = vmatprep.subr.mxu0 0.0
      %717 = vmatpush1.msra.mxu0 0.0
      %718 = vmatprep.subr.mxu0 0.0
      %719 = vmatpush1.msra.mxu0 0.0
      %720 = vmatprep.subr.mxu0 0.0
      %721 = vmatpush1.msra.mxu0 0.0
      %722 = vmatprep.subr.mxu0 0.0
      %723 = vmatpush1.msra.mxu0 0.0
      %724 = vmatprep.subr.mxu0 0.0
      %725 = vmatpush1.msra.mxu0 0.0
      %726 = vmatprep.subr.mxu0 0.0
      %727 = vmatpush1.msra.mxu0 0.0
      %728 = vmatprep.subr.mxu0 0.0
      %729 = vmatpush1.msra.mxu0 0.0
      %730 = vmatprep.subr.mxu0 0.0
      %731 = vmatpush1.msra.mxu0 0.0
      %732 = vmatprep.subr.mxu0 0.0
      %733 = vmatpush1.msra.mxu0 0.0
      %734 = vmatprep.subr.mxu0 0.0
      %735 = vmatpush1.msra.mxu0 0.0
      %736 = vmatprep.subr.mxu0 0.0
      %737 = vmatpush1.msra.mxu0 0.0
      %738 = vmatprep.subr.mxu0 0.0
      %739 = vmatpush1.msra.mxu0 %v497
      %740 = vmatprep.subr.mxu0 0.0
      %741 = vmatpush1.msra.mxu0 %v491
      %742 = vmatprep.subr.mxu0 0.0
      %743 = vmatpush1.msra.mxu0 %v485
      %744 = vmatprep.subr.mxu0 0.0
      %745 = vmatpush1.msra.mxu0 %v479
      %746 = vmatprep.subr.mxu0 0.0
      %747 = vmatpush2.msra.mxu0 0.0
      %748 = vmatprep.subr.mxu0 0.0
      %749 = vmatpush2.msra.mxu0 0.0
      %750 = vmatprep.subr.mxu0 0.0
      %751 = vmatpush2.msra.mxu0 0.0
      %752 = vmatprep.subr.mxu0 0.0
      %753 = vmatpush2.msra.mxu0 0.0
      %754 = vmatprep.subr.mxu0 0.0
      %755 = vmatpush2.msra.mxu0 0.0
      %756 = vmatprep.subr.mxu0 0.0
      %757 = vmatpush2.msra.mxu0 0.0
      %758 = vmatprep.subr.mxu0 0.0
      %759 = vmatpush2.msra.mxu0 0.0
      %760 = vmatprep.subr.mxu0 0.0
      %761 = vmatpush2.msra.mxu0 0.0
      %762 = vmatprep.subr.mxu0 0.0
      %763 = vmatpush2.msra.mxu0 0.0
      %764 = vmatprep.subr.mxu0 0.0
      %765 = vmatpush2.msra.mxu0 0.0
      %766 = vmatprep.subr.mxu0 0.0
      %767 = vmatpush2.msra.mxu0 0.0
      %768 = vmatprep.subr.mxu0 0.0
      %769 = vmatpush2.msra.mxu0 0.0
      %770 = vmatprep.subr.mxu0 0.0
      %771 = vmatpush2.msra.mxu0 0.0
      %772 = vmatprep.subr.mxu0 0.0
      %773 = vmatpush2.msra.mxu0 0.0
      %774 = vmatprep.subr.mxu0 0.0
      %775 = vmatpush2.msra.mxu0 0.0
      %776 = vmatprep.subr.mxu0 0.0
      %777 = vmatpush2.msra.mxu0 0.0
      %778 = vmatprep.mubr.f32.mxu0 0.0
      %779 = vmatmul.mubr.f32.gmra.mxu0 %v703
      %v780 = vpop.f32.mrf.mxu0
      %v781 = vadd.f32 0.0, %v780
      %v782 = vpop.f32.mrf.mxu0
      %783 = vmatprep.mubr.f32.mxu0 0.0
      %784 = vmatmul.mubr.f32.gmra.mxu0 %v706
      %v785 = vpop.f32.mrf.mxu0
      %v786 = vadd.f32 0.0, %v785
      %v787 = vpop.f32.mrf.mxu0
      %788 = vmatprep.mubr.f32.mxu0 0.0
      %789 = vmatmul.mubr.f32.gmra.mxu0 %v709
      %v790 = vpop.f32.mrf.mxu0
      %v791 = vadd.f32 0.0, %v790
      %v792 = vpop.f32.mrf.mxu0
      %793 = vmatprep.mubr.f32.mxu0 0.0
      %794 = vmatmul.mubr.f32.gmra.mxu0 %v712
      %v795 = vpop.f32.mrf.mxu0
      %v796 = vadd.f32 0.0, %v795
      %v797 = vpop.f32.mrf.mxu0
      %798 = vdwg.mxu0
      %v799 = vadd.f32 %v453, %v684
      %v800 = vadd.f32 %v459, %v689
      %v801 = vadd.f32 %v465, %v694
      %v802 = vadd.f32 %v471, %v699
      %v803 = vadd.f32 %v477, %v781
      %v804 = vadd.f32 %v483, %v786
      %v805 = vadd.f32 %v489, %v791
      %v806 = vadd.f32 %v495, %v796
      %v808 = vsel %vm604, %v345, 0
      %v811 = vsel %vm604, %v346, 0
      %v814 = vsel %vm604, %v347, 0
      %v817 = vsel %vm604, %v348, 0
      %819 = vmatprep.subr.mxu0 0.0
      %820 = vmatpush1.msra.mxu0 0.0
      %821 = vmatprep.subr.mxu0 0.0
      %822 = vmatpush1.msra.mxu0 0.0
      %823 = vmatprep.subr.mxu0 0.0
      %824 = vmatpush1.msra.mxu0 0.0
      %825 = vmatprep.subr.mxu0 0.0
      %826 = vmatpush1.msra.mxu0 0.0
      %827 = vmatprep.subr.mxu0 0.0
      %828 = vmatpush1.msra.mxu0 0.0
      %829 = vmatprep.subr.mxu0 0.0
      %830 = vmatpush1.msra.mxu0 0.0
      %831 = vmatprep.subr.mxu0 0.0
      %832 = vmatpush1.msra.mxu0 0.0
      %833 = vmatprep.subr.mxu0 0.0
      %834 = vmatpush1.msra.mxu0 0.0
      %835 = vmatprep.subr.mxu0 0.0
      %836 = vmatpush1.msra.mxu0 0.0
      %837 = vmatprep.subr.mxu0 0.0
      %838 = vmatpush1.msra.mxu0 0.0
      %839 = vmatprep.subr.mxu0 0.0
      %840 = vmatpush1.msra.mxu0 0.0
      %841 = vmatprep.subr.mxu0 0.0
      %842 = vmatpush1.msra.mxu0 0.0
      %843 = vmatprep.subr.mxu0 0.0
      %844 = vmatpush1.msra.mxu0 %v581
      %845 = vmatprep.subr.mxu0 0.0
      %846 = vmatpush1.msra.mxu0 %v576
      %847 = vmatprep.subr.mxu0 0.0
      %848 = vmatpush1.msra.mxu0 %v571
      %849 = vmatprep.subr.mxu0 0.0
      %850 = vmatpush1.msra.mxu0 %v566
      %851 = vmatprep.subr.mxu0 0.0
      %852 = vmatpush2.msra.mxu0 0.0
      %853 = vmatprep.subr.mxu0 0.0
      %854 = vmatpush2.msra.mxu0 0.0
      %855 = vmatprep.subr.mxu0 0.0
      %856 = vmatpush2.msra.mxu0 0.0
      %857 = vmatprep.subr.mxu0 0.0
      %858 = vmatpush2.msra.mxu0 0.0
      %859 = vmatprep.subr.mxu0 0.0
      %860 = vmatpush2.msra.mxu0 0.0
      %861 = vmatprep.subr.mxu0 0.0
      %862 = vmatpush2.msra.mxu0 0.0
      %863 = vmatprep.subr.mxu0 0.0
      %864 = vmatpush2.msra.mxu0 0.0
      %865 = vmatprep.subr.mxu0 0.0
      %866 = vmatpush2.msra.mxu0 0.0
      %867 = vmatprep.subr.mxu0 0.0
      %868 = vmatpush2.msra.mxu0 0.0
      %869 = vmatprep.subr.mxu0 0.0
      %870 = vmatpush2.msra.mxu0 0.0
      %871 = vmatprep.subr.mxu0 0.0
      %872 = vmatpush2.msra.mxu0 0.0
      %873 = vmatprep.subr.mxu0 0.0
      %874 = vmatpush2.msra.mxu0 0.0
      %875 = vmatprep.subr.mxu0 0.0
      %876 = vmatpush2.msra.mxu0 0.0
      %877 = vmatprep.subr.mxu0 0.0
      %878 = vmatpush2.msra.mxu0 0.0
      %879 = vmatprep.subr.mxu0 0.0
      %880 = vmatpush2.msra.mxu0 0.0
      %881 = vmatprep.subr.mxu0 0.0
      %882 = vmatpush2.msra.mxu0 0.0
      %883 = vmatprep.mubr.f32.mxu0 0.0
      %884 = vmatmul.mubr.f32.gmra.mxu0 %v808
      %v885 = vpop.f32.mrf.mxu0
      %v886 = vadd.f32 0.0, %v885
      %v887 = vpop.f32.mrf.mxu0
      %888 = vmatprep.mubr.f32.mxu0 0.0
      %889 = vmatmul.mubr.f32.gmra.mxu0 %v811
      %v890 = vpop.f32.mrf.mxu0
      %v891 = vadd.f32 0.0, %v890
      %v892 = vpop.f32.mrf.mxu0
      %893 = vmatprep.mubr.f32.mxu0 0.0
      %894 = vmatmul.mubr.f32.gmra.mxu0 %v814
      %v895 = vpop.f32.mrf.mxu0
      %v896 = vadd.f32 0.0, %v895
      %v897 = vpop.f32.mrf.mxu0
      %898 = vmatprep.mubr.f32.mxu0 0.0
      %899 = vmatmul.mubr.f32.gmra.mxu0 %v817
      %v900 = vpop.f32.mrf.mxu0
      %v901 = vadd.f32 0.0, %v900
      %v902 = vpop.f32.mrf.mxu0
      %903 = vdwg.mxu0
      %v905 = vsel %vm604, %v349, 0
      %v908 = vsel %vm604, %v350, 0
      %v911 = vsel %vm604, %v351, 0
      %v914 = vsel %vm604, %v352, 0
      %916 = vmatprep.subr.mxu0 0.0
      %917 = vmatpush1.msra.mxu0 0.0
      %918 = vmatprep.subr.mxu0 0.0
      %919 = vmatpush1.msra.mxu0 0.0
      %920 = vmatprep.subr.mxu0 0.0
      %921 = vmatpush1.msra.mxu0 0.0
      %922 = vmatprep.subr.mxu0 0.0
      %923 = vmatpush1.msra.mxu0 0.0
      %924 = vmatprep.subr.mxu0 0.0
      %925 = vmatpush1.msra.mxu0 0.0
      %926 = vmatprep.subr.mxu0 0.0
      %927 = vmatpush1.msra.mxu0 0.0
      %928 = vmatprep.subr.mxu0 0.0
      %929 = vmatpush1.msra.mxu0 0.0
      %930 = vmatprep.subr.mxu0 0.0
      %931 = vmatpush1.msra.mxu0 0.0
      %932 = vmatprep.subr.mxu0 0.0
      %933 = vmatpush1.msra.mxu0 0.0
      %934 = vmatprep.subr.mxu0 0.0
      %935 = vmatpush1.msra.mxu0 0.0
      %936 = vmatprep.subr.mxu0 0.0
      %937 = vmatpush1.msra.mxu0 0.0
      %938 = vmatprep.subr.mxu0 0.0
      %939 = vmatpush1.msra.mxu0 0.0
      %940 = vmatprep.subr.mxu0 0.0
      %941 = vmatpush1.msra.mxu0 %v601
      %942 = vmatprep.subr.mxu0 0.0
      %943 = vmatpush1.msra.mxu0 %v596
      %944 = vmatprep.subr.mxu0 0.0
      %945 = vmatpush1.msra.mxu0 %v591
      %946 = vmatprep.subr.mxu0 0.0
      %947 = vmatpush1.msra.mxu0 %v586
      %948 = vmatprep.subr.mxu0 0.0
      %949 = vmatpush2.msra.mxu0 0.0
      %950 = vmatprep.subr.mxu0 0.0
      %951 = vmatpush2.msra.mxu0 0.0
      %952 = vmatprep.subr.mxu0 0.0
      %953 = vmatpush2.msra.mxu0 0.0
      %954 = vmatprep.subr.mxu0 0.0
      %955 = vmatpush2.msra.mxu0 0.0
      %956 = vmatprep.subr.mxu0 0.0
      %957 = vmatpush2.msra.mxu0 0.0
      %958 = vmatprep.subr.mxu0 0.0
      %959 = vmatpush2.msra.mxu0 0.0
      %960 = vmatprep.subr.mxu0 0.0
      %961 = vmatpush2.msra.mxu0 0.0
      %962 = vmatprep.subr.mxu0 0.0
      %963 = vmatpush2.msra.mxu0 0.0
      %964 = vmatprep.subr.mxu0 0.0
      %965 = vmatpush2.msra.mxu0 0.0
      %966 = vmatprep.subr.mxu0 0.0
      %967 = vmatpush2.msra.mxu0 0.0
      %968 = vmatprep.subr.mxu0 0.0
      %969 = vmatpush2.msra.mxu0 0.0
      %970 = vmatprep.subr.mxu0 0.0
      %971 = vmatpush2.msra.mxu0 0.0
      %972 = vmatprep.subr.mxu0 0.0
      %973 = vmatpush2.msra.mxu0 0.0
      %974 = vmatprep.subr.mxu0 0.0
      %975 = vmatpush2.msra.mxu0 0.0
      %976 = vmatprep.subr.mxu0 0.0
      %977 = vmatpush2.msra.mxu0 0.0
      %978 = vmatprep.subr.mxu0 0.0
      %979 = vmatpush2.msra.mxu0 0.0
      %980 = vmatprep.mubr.f32.mxu0 0.0
      %981 = vmatmul.mubr.f32.gmra.mxu0 %v905
      %v982 = vpop.f32.mrf.mxu0
      %v983 = vadd.f32 0.0, %v982
      %v984 = vpop.f32.mrf.mxu0
      %985 = vmatprep.mubr.f32.mxu0 0.0
      %986 = vmatmul.mubr.f32.gmra.mxu0 %v908
      %v987 = vpop.f32.mrf.mxu0
      %v988 = vadd.f32 0.0, %v987
      %v989 = vpop.f32.mrf.mxu0
      %990 = vmatprep.mubr.f32.mxu0 0.0
      %991 = vmatmul.mubr.f32.gmra.mxu0 %v911
      %v992 = vpop.f32.mrf.mxu0
      %v993 = vadd.f32 0.0, %v992
      %v994 = vpop.f32.mrf.mxu0
      %995 = vmatprep.mubr.f32.mxu0 0.0
      %996 = vmatmul.mubr.f32.gmra.mxu0 %v914
      %v997 = vpop.f32.mrf.mxu0
      %v998 = vadd.f32 0.0, %v997
      %v999 = vpop.f32.mrf.mxu0
      %1000 = vdwg.mxu0
      %v1001 = vadd.f32 %v799, %v886
      %v1002 = vadd.f32 %v800, %v891
      %v1003 = vadd.f32 %v801, %v896
      %v1004 = vadd.f32 %v802, %v901
      %v1005 = vadd.f32 %v803, %v983
      %v1006 = vadd.f32 %v804, %v988
      %v1007 = vadd.f32 %v805, %v993
      %v1008 = vadd.f32 %v806, %v998
      %v1009 = vmax.f32 %v1001, 0.0
      %v1010 = vmax.f32 %v1002, 0.0
      %v1011 = vmax.f32 %v1003, 0.0
      %v1012 = vmax.f32 %v1004, 0.0
      %v1013 = vmax.f32 %v1005, 0.0
      %v1014 = vmax.f32 %v1006, 0.0
      %v1015 = vmax.f32 %v1007, 0.0
      %v1016 = vmax.f32 %v1008, 0.0
      %1017 = vmatprep.subr.mxu0 %v335
      %1018 = vmatpush1.msra.mxu0 %v334
      %1019 = vmatprep.subr.mxu0 %v332
      %1020 = vmatpush1.msra.mxu0 %v331
      %1021 = vmatprep.subr.mxu0 %v329
      %1022 = vmatpush1.msra.mxu0 %v328
      %1023 = vmatprep.subr.mxu0 %v326
      %1024 = vmatpush1.msra.mxu0 %v325
      %1025 = vmatprep.subr.mxu0 %v323
      %1026 = vmatpush1.msra.mxu0 %v322
      %1027 = vmatprep.subr.mxu0 %v320
      %1028 = vmatpush1.msra.mxu0 %v319
      %1029 = vmatprep.subr.mxu0 %v317
      %1030 = vmatpush1.msra.mxu0 %v316
      %1031 = vmatprep.subr.mxu0 %v314
      %1032 = vmatpush1.msra.mxu0 %v313
      %1033 = vmatprep.subr.mxu0 %v311
      %1034 = vmatpush1.msra.mxu0 %v310
      %1035 = vmatprep.subr.mxu0 %v308
      %1036 = vmatpush1.msra.mxu0 %v307
      %1037 = vmatprep.subr.mxu0 %v305
      %1038 = vmatpush1.msra.mxu0 %v304
      %1039 = vmatprep.subr.mxu0 %v302
      %1040 = vmatpush1.msra.mxu0 %v301
      %1041 = vmatprep.subr.mxu0 %v299
      %1042 = vmatpush1.msra.mxu0 %v298
      %1043 = vmatprep.subr.mxu0 %v296
      %1044 = vmatpush1.msra.mxu0 %v295
      %1045 = vmatprep.subr.mxu0 %v293
      %1046 = vmatpush1.msra.mxu0 %v292
      %1047 = vmatprep.subr.mxu0 %v290
      %1048 = vmatpush1.msra.mxu0 %v289
      %1049 = vmatprep.subr.mxu0 0.0
      %1050 = vmatpush2.msra.mxu0 0.0
      %1051 = vmatprep.subr.mxu0 0.0
      %1052 = vmatpush2.msra.mxu0 0.0
      %1053 = vmatprep.subr.mxu0 0.0
      %1054 = vmatpush2.msra.mxu0 0.0
      %1055 = vmatprep.subr.mxu0 0.0
      %1056 = vmatpush2.msra.mxu0 0.0
      %1057 = vmatprep.subr.mxu0 0.0
      %1058 = vmatpush2.msra.mxu0 0.0
      %1059 = vmatprep.subr.mxu0 0.0
      %1060 = vmatpush2.msra.mxu0 0.0
      %1061 = vmatprep.subr.mxu0 0.0
      %1062 = vmatpush2.msra.mxu0 0.0
      %1063 = vmatprep.subr.mxu0 0.0
      %1064 = vmatpush2.msra.mxu0 0.0
      %1065 = vmatprep.subr.mxu0 0.0
      %1066 = vmatpush2.msra.mxu0 0.0
      %1067 = vmatprep.subr.mxu0 0.0
      %1068 = vmatpush2.msra.mxu0 0.0
      %1069 = vmatprep.subr.mxu0 0.0
      %1070 = vmatpush2.msra.mxu0 0.0
      %1071 = vmatprep.subr.mxu0 0.0
      %1072 = vmatpush2.msra.mxu0 0.0
      %1073 = vmatprep.subr.mxu0 0.0
      %1074 = vmatpush2.msra.mxu0 0.0
      %1075 = vmatprep.subr.mxu0 0.0
      %1076 = vmatpush2.msra.mxu0 0.0
      %1077 = vmatprep.subr.mxu0 0.0
      %1078 = vmatpush2.msra.mxu0 0.0
      %1079 = vmatprep.subr.mxu0 0.0
      %1080 = vmatpush2.msra.mxu0 0.0
      %1081 = vmatprep.mubr.f32.mxu0 0.0
      %1082 = vmatmul.mubr.f32.gmra.mxu0 %v1009
      %v1083 = vpop.f32.mrf.mxu0
      %v1084 = vadd.f32 0.0, %v1083
      %v1085 = vpop.f32.mrf.mxu0
      %v1086 = vadd.f32 0.0, %v1085
      %1087 = vmatprep.mubr.f32.mxu0 0.0
      %1088 = vmatmul.mubr.f32.gmra.mxu0 %v1010
      %v1089 = vpop.f32.mrf.mxu0
      %v1090 = vadd.f32 0.0, %v1089
      %v1091 = vpop.f32.mrf.mxu0
      %v1092 = vadd.f32 0.0, %v1091
      %1093 = vmatprep.mubr.f32.mxu0 0.0
      %1094 = vmatmul.mubr.f32.gmra.mxu0 %v1011
      %v1095 = vpop.f32.mrf.mxu0
      %v1096 = vadd.f32 0.0, %v1095
      %v1097 = vpop.f32.mrf.mxu0
      %v1098 = vadd.f32 0.0, %v1097
      %1099 = vmatprep.mubr.f32.mxu0 0.0
      %1100 = vmatmul.mubr.f32.gmra.mxu0 %v1012
      %v1101 = vpop.f32.mrf.mxu0
      %v1102 = vadd.f32 0.0, %v1101
      %v1103 = vpop.f32.mrf.mxu0
      %v1104 = vadd.f32 0.0, %v1103
      %1105 = vmatprep.mubr.f32.mxu0 0.0
      %1106 = vmatmul.mubr.f32.gmra.mxu0 %v1013
      %v1107 = vpop.f32.mrf.mxu0
      %v1108 = vadd.f32 0.0, %v1107
      %v1109 = vpop.f32.mrf.mxu0
      %v1110 = vadd.f32 0.0, %v1109
      %1111 = vmatprep.mubr.f32.mxu0 0.0
      %1112 = vmatmul.mubr.f32.gmra.mxu0 %v1014
      %v1113 = vpop.f32.mrf.mxu0
      %v1114 = vadd.f32 0.0, %v1113
      %v1115 = vpop.f32.mrf.mxu0
      %v1116 = vadd.f32 0.0, %v1115
      %1117 = vmatprep.mubr.f32.mxu0 0.0
      %1118 = vmatmul.mubr.f32.gmra.mxu0 %v1015
      %v1119 = vpop.f32.mrf.mxu0
      %v1120 = vadd.f32 0.0, %v1119
      %v1121 = vpop.f32.mrf.mxu0
      %v1122 = vadd.f32 0.0, %v1121
      %1123 = vmatprep.mubr.f32.mxu0 0.0
      %1124 = vmatmul.mubr.f32.gmra.mxu0 %v1016
      %v1125 = vpop.f32.mrf.mxu0
      %v1126 = vadd.f32 0.0, %v1125
      %v1127 = vpop.f32.mrf.mxu0
      %v1128 = vadd.f32 0.0, %v1127
      %1129 = vdwg.mxu0
      %1130 = vmatprep.subr.mxu0 0.0
      %1131 = vmatpush1.msra.mxu0 %v336
      %1132 = vmatprep.subr.mxu0 0.0
      %1133 = vmatpush1.msra.mxu0 %v333
      %1134 = vmatprep.subr.mxu0 0.0
      %1135 = vmatpush1.msra.mxu0 %v330
      %1136 = vmatprep.subr.mxu0 0.0
      %1137 = vmatpush1.msra.mxu0 %v327
      %1138 = vmatprep.subr.mxu0 0.0
      %1139 = vmatpush1.msra.mxu0 %v324
      %1140 = vmatprep.subr.mxu0 0.0
      %1141 = vmatpush1.msra.mxu0 %v321
      %1142 = vmatprep.subr.mxu0 0.0
      %1143 = vmatpush1.msra.mxu0 %v318
      %1144 = vmatprep.subr.mxu0 0.0
      %1145 = vmatpush1.msra.mxu0 %v315
      %1146 = vmatprep.subr.mxu0 0.0
      %1147 = vmatpush1.msra.mxu0 %v312
      %1148 = vmatprep.subr.mxu0 0.0
      %1149 = vmatpush1.msra.mxu0 %v309
      %1150 = vmatprep.subr.mxu0 0.0
      %1151 = vmatpush1.msra.mxu0 %v306
      %1152 = vmatprep.subr.mxu0 0.0
      %1153 = vmatpush1.msra.mxu0 %v303
      %1154 = vmatprep.subr.mxu0 0.0
      %1155 = vmatpush1.msra.mxu0 %v300
      %1156 = vmatprep.subr.mxu0 0.0
      %1157 = vmatpush1.msra.mxu0 %v297
      %1158 = vmatprep.subr.mxu0 0.0
      %1159 = vmatpush1.msra.mxu0 %v294
      %1160 = vmatprep.subr.mxu0 0.0
      %1161 = vmatpush1.msra.mxu0 %v291
      %1162 = vmatprep.subr.mxu0 0.0
      %1163 = vmatpush2.msra.mxu0 0.0
      %1164 = vmatprep.subr.mxu0 0.0
      %1165 = vmatpush2.msra.mxu0 0.0
      %1166 = vmatprep.subr.mxu0 0.0
      %1167 = vmatpush2.msra.mxu0 0.0
      %1168 = vmatprep.subr.mxu0 0.0
      %1169 = vmatpush2.msra.mxu0 0.0
      %1170 = vmatprep.subr.mxu0 0.0
      %1171 = vmatpush2.msra.mxu0 0.0
      %1172 = vmatprep.subr.mxu0 0.0
      %1173 = vmatpush2.msra.mxu0 0.0
      %1174 = vmatprep.subr.mxu0 0.0
      %1175 = vmatpush2.msra.mxu0 0.0
      %1176 = vmatprep.subr.mxu0 0.0
      %1177 = vmatpush2.msra.mxu0 0.0
      %1178 = vmatprep.subr.mxu0 0.0
      %1179 = vmatpush2.msra.mxu0 0.0
      %1180 = vmatprep.subr.mxu0 0.0
      %1181 = vmatpush2.msra.mxu0 0.0
      %1182 = vmatprep.subr.mxu0 0.0
      %1183 = vmatpush2.msra.mxu0 0.0
      %1184 = vmatprep.subr.mxu0 0.0
      %1185 = vmatpush2.msra.mxu0 0.0
      %1186 = vmatprep.subr.mxu0 0.0
      %1187 = vmatpush2.msra.mxu0 0.0
      %1188 = vmatprep.subr.mxu0 0.0
      %1189 = vmatpush2.msra.mxu0 0.0
      %1190 = vmatprep.subr.mxu0 0.0
      %1191 = vmatpush2.msra.mxu0 0.0
      %1192 = vmatprep.subr.mxu0 0.0
      %1193 = vmatpush2.msra.mxu0 0.0
      %1194 = vmatprep.mubr.f32.mxu0 0.0
      %1195 = vmatmul.mubr.f32.gmra.mxu0 %v1009
      %v1196 = vpop.f32.mrf.mxu0
      %v1197 = vadd.f32 0.0, %v1196
      %v1198 = vpop.f32.mrf.mxu0
      %1199 = vmatprep.mubr.f32.mxu0 0.0
      %1200 = vmatmul.mubr.f32.gmra.mxu0 %v1010
      %v1201 = vpop.f32.mrf.mxu0
      %v1202 = vadd.f32 0.0, %v1201
      %v1203 = vpop.f32.mrf.mxu0
      %1204 = vmatprep.mubr.f32.mxu0 0.0
      %1205 = vmatmul.mubr.f32.gmra.mxu0 %v1011
      %v1206 = vpop.f32.mrf.mxu0
      %v1207 = vadd.f32 0.0, %v1206
      %v1208 = vpop.f32.mrf.mxu0
      %1209 = vmatprep.mubr.f32.mxu0 0.0
      %1210 = vmatmul.mubr.f32.gmra.mxu0 %v1012
      %v1211 = vpop.f32.mrf.mxu0
      %v1212 = vadd.f32 0.0, %v1211
      %v1213 = vpop.f32.mrf.mxu0
      %1214 = vmatprep.mubr.f32.mxu0 0.0
      %1215 = vmatmul.mubr.f32.gmra.mxu0 %v1013
      %v1216 = vpop.f32.mrf.mxu0
      %v1217 = vadd.f32 0.0, %v1216
      %v1218 = vpop.f32.mrf.mxu0
      %1219 = vmatprep.mubr.f32.mxu0 0.0
      %1220 = vmatmul.mubr.f32.gmra.mxu0 %v1014
      %v1221 = vpop.f32.mrf.mxu0
      %v1222 = vadd.f32 0.0, %v1221
      %v1223 = vpop.f32.mrf.mxu0
      %1224 = vmatprep.mubr.f32.mxu0 0.0
      %1225 = vmatmul.mubr.f32.gmra.mxu0 %v1015
      %v1226 = vpop.f32.mrf.mxu0
      %v1227 = vadd.f32 0.0, %v1226
      %v1228 = vpop.f32.mrf.mxu0
      %1229 = vmatprep.mubr.f32.mxu0 0.0
      %1230 = vmatmul.mubr.f32.gmra.mxu0 %v1016
      %v1231 = vpop.f32.mrf.mxu0
      %v1232 = vadd.f32 0.0, %v1231
      %v1233 = vpop.f32.mrf.mxu0
      %1234 = vdwg.mxu0
      %1235 = vmatprep.subr.mxu0 0.0
      %1236 = vmatpush1.msra.mxu0 0.0
      %1237 = vmatprep.subr.mxu0 0.0
      %1238 = vmatpush1.msra.mxu0 0.0
      %1239 = vmatprep.subr.mxu0 0.0
      %1240 = vmatpush1.msra.mxu0 0.0
      %1241 = vmatprep.subr.mxu0 0.0
      %1242 = vmatpush1.msra.mxu0 0.0
      %1243 = vmatprep.subr.mxu0 0.0
      %1244 = vmatpush1.msra.mxu0 0.0
      %1245 = vmatprep.subr.mxu0 0.0
      %1246 = vmatpush1.msra.mxu0 0.0
      %1247 = vmatprep.subr.mxu0 0.0
      %1248 = vmatpush1.msra.mxu0 0.0
      %1249 = vmatprep.subr.mxu0 0.0
      %1250 = vmatpush1.msra.mxu0 0.0
      %1251 = vmatprep.subr.mxu0 0.0
      %1252 = vmatpush1.msra.mxu0 0.0
      %1253 = vmatprep.subr.mxu0 0.0
      %1254 = vmatpush1.msra.mxu0 0.0
      %1255 = vmatprep.subr.mxu0 0.0
      %1256 = vmatpush1.msra.mxu0 0.0
      %1257 = vmatprep.subr.mxu0 0.0
      %1258 = vmatpush1.msra.mxu0 0.0
      %1259 = vmatprep.subr.mxu0 0.0
      %1260 = vmatpush1.msra.mxu0 %v1104
      %1261 = vmatprep.subr.mxu0 0.0
      %1262 = vmatpush1.msra.mxu0 %v1098
      %1263 = vmatprep.subr.mxu0 0.0
      %1264 = vmatpush1.msra.mxu0 %v1092
      %1265 = vmatprep.subr.mxu0 0.0
      %1266 = vmatpush1.msra.mxu0 %v1086
      %1267 = vmatprep.subr.mxu0 0.0
      %1268 = vmatpush2.msra.mxu0 0.0
      %1269 = vmatprep.subr.mxu0 0.0
      %1270 = vmatpush2.msra.mxu0 0.0
      %1271 = vmatprep.subr.mxu0 0.0
      %1272 = vmatpush2.msra.mxu0 0.0
      %1273 = vmatprep.subr.mxu0 0.0
      %1274 = vmatpush2.msra.mxu0 0.0
      %1275 = vmatprep.subr.mxu0 0.0
      %1276 = vmatpush2.msra.mxu0 0.0
      %1277 = vmatprep.subr.mxu0 0.0
      %1278 = vmatpush2.msra.mxu0 0.0
      %1279 = vmatprep.subr.mxu0 0.0
      %1280 = vmatpush2.msra.mxu0 0.0
      %1281 = vmatprep.subr.mxu0 0.0
      %1282 = vmatpush2.msra.mxu0 0.0
      %1283 = vmatprep.subr.mxu0 0.0
      %1284 = vmatpush2.msra.mxu0 0.0
      %1285 = vmatprep.subr.mxu0 0.0
      %1286 = vmatpush2.msra.mxu0 0.0
      %1287 = vmatprep.subr.mxu0 0.0
      %1288 = vmatpush2.msra.mxu0 0.0
      %1289 = vmatprep.subr.mxu0 0.0
      %1290 = vmatpush2.msra.mxu0 0.0
      %1291 = vmatprep.subr.mxu0 0.0
      %1292 = vmatpush2.msra.mxu0 0.0
      %1293 = vmatprep.subr.mxu0 0.0
      %1294 = vmatpush2.msra.mxu0 0.0
      %1295 = vmatprep.subr.mxu0 0.0
      %1296 = vmatpush2.msra.mxu0 0.0
      %1297 = vmatprep.subr.mxu0 0.0
      %1298 = vmatpush2.msra.mxu0 0.0
      %1299 = vmatprep.mubr.f32.mxu0 0.0
      %1300 = vmatmul.mubr.f32.gmra.mxu0 %v606
      %v1301 = vpop.f32.mrf.mxu0
      %v1302 = vadd.f32 0.0, %v1301
      %v1303 = vpop.f32.mrf.mxu0
      %1304 = vmatprep.mubr.f32.mxu0 0.0
      %1305 = vmatmul.mubr.f32.gmra.mxu0 %v609
      %v1306 = vpop.f32.mrf.mxu0
      %v1307 = vadd.f32 0.0, %v1306
      %v1308 = vpop.f32.mrf.mxu0
      %1309 = vmatprep.mubr.f32.mxu0 0.0
      %1310 = vmatmul.mubr.f32.gmra.mxu0 %v612
      %v1311 = vpop.f32.mrf.mxu0
      %v1312 = vadd.f32 0.0, %v1311
      %v1313 = vpop.f32.mrf.mxu0
      %1314 = vmatprep.mubr.f32.mxu0 0.0
      %1315 = vmatmul.mubr.f32.gmra.mxu0 %v615
      %v1316 = vpop.f32.mrf.mxu0
      %v1317 = vadd.f32 0.0, %v1316
      %v1318 = vpop.f32.mrf.mxu0
      %1319 = vdwg.mxu0
      %1320 = vmatprep.subr.mxu0 0.0
      %1321 = vmatpush1.msra.mxu0 0.0
      %1322 = vmatprep.subr.mxu0 0.0
      %1323 = vmatpush1.msra.mxu0 0.0
      %1324 = vmatprep.subr.mxu0 0.0
      %1325 = vmatpush1.msra.mxu0 0.0
      %1326 = vmatprep.subr.mxu0 0.0
      %1327 = vmatpush1.msra.mxu0 0.0
      %1328 = vmatprep.subr.mxu0 0.0
      %1329 = vmatpush1.msra.mxu0 0.0
      %1330 = vmatprep.subr.mxu0 0.0
      %1331 = vmatpush1.msra.mxu0 0.0
      %1332 = vmatprep.subr.mxu0 0.0
      %1333 = vmatpush1.msra.mxu0 0.0
      %1334 = vmatprep.subr.mxu0 0.0
      %1335 = vmatpush1.msra.mxu0 0.0
      %1336 = vmatprep.subr.mxu0 0.0
      %1337 = vmatpush1.msra.mxu0 0.0
      %1338 = vmatprep.subr.mxu0 0.0
      %1339 = vmatpush1.msra.mxu0 0.0
      %1340 = vmatprep.subr.mxu0 0.0
      %1341 = vmatpush1.msra.mxu0 0.0
      %1342 = vmatprep.subr.mxu0 0.0
      %1343 = vmatpush1.msra.mxu0 0.0
      %1344 = vmatprep.subr.mxu0 0.0
      %1345 = vmatpush1.msra.mxu0 %v1128
      %1346 = vmatprep.subr.mxu0 0.0
      %1347 = vmatpush1.msra.mxu0 %v1122
      %1348 = vmatprep.subr.mxu0 0.0
      %1349 = vmatpush1.msra.mxu0 %v1116
      %1350 = vmatprep.subr.mxu0 0.0
      %1351 = vmatpush1.msra.mxu0 %v1110
      %1352 = vmatprep.subr.mxu0 0.0
      %1353 = vmatpush2.msra.mxu0 0.0
      %1354 = vmatprep.subr.mxu0 0.0
      %1355 = vmatpush2.msra.mxu0 0.0
      %1356 = vmatprep.subr.mxu0 0.0
      %1357 = vmatpush2.msra.mxu0 0.0
      %1358 = vmatprep.subr.mxu0 0.0
      %1359 = vmatpush2.msra.mxu0 0.0
      %1360 = vmatprep.subr.mxu0 0.0
      %1361 = vmatpush2.msra.mxu0 0.0
      %1362 = vmatprep.subr.mxu0 0.0
      %1363 = vmatpush2.msra.mxu0 0.0
      %1364 = vmatprep.subr.mxu0 0.0
      %1365 = vmatpush2.msra.mxu0 0.0
      %1366 = vmatprep.subr.mxu0 0.0
      %1367 = vmatpush2.msra.mxu0 0.0
      %1368 = vmatprep.subr.mxu0 0.0
      %1369 = vmatpush2.msra.mxu0 0.0
      %1370 = vmatprep.subr.mxu0 0.0
      %1371 = vmatpush2.msra.mxu0 0.0
      %1372 = vmatprep.subr.mxu0 0.0
      %1373 = vmatpush2.msra.mxu0 0.0
      %1374 = vmatprep.subr.mxu0 0.0
      %1375 = vmatpush2.msra.mxu0 0.0
      %1376 = vmatprep.subr.mxu0 0.0
      %1377 = vmatpush2.msra.mxu0 0.0
      %1378 = vmatprep.subr.mxu0 0.0
      %1379 = vmatpush2.msra.mxu0 0.0
      %1380 = vmatprep.subr.mxu0 0.0
      %1381 = vmatpush2.msra.mxu0 0.0
      %1382 = vmatprep.subr.mxu0 0.0
      %1383 = vmatpush2.msra.mxu0 0.0
      %1384 = vmatprep.mubr.f32.mxu0 0.0
      %1385 = vmatmul.mubr.f32.gmra.mxu0 %v703
      %v1386 = vpop.f32.mrf.mxu0
      %v1387 = vadd.f32 0.0, %v1386
      %v1388 = vpop.f32.mrf.mxu0
      %1389 = vmatprep.mubr.f32.mxu0 0.0
      %1390 = vmatmul.mubr.f32.gmra.mxu0 %v706
      %v1391 = vpop.f32.mrf.mxu0
      %v1392 = vadd.f32 0.0, %v1391
      %v1393 = vpop.f32.mrf.mxu0
      %1394 = vmatprep.mubr.f32.mxu0 0.0
      %1395 = vmatmul.mubr.f32.gmra.mxu0 %v709
      %v1396 = vpop.f32.mrf.mxu0
      %v1397 = vadd.f32 0.0, %v1396
      %v1398 = vpop.f32.mrf.mxu0
      %1399 = vmatprep.mubr.f32.mxu0 0.0
      %1400 = vmatmul.mubr.f32.gmra.mxu0 %v712
      %v1401 = vpop.f32.mrf.mxu0
      %v1402 = vadd.f32 0.0, %v1401
      %v1403 = vpop.f32.mrf.mxu0
      %1404 = vdwg.mxu0
      %v1405 = vadd.f32 %v1084, %v1302
      %v1406 = vadd.f32 %v1090, %v1307
      %v1407 = vadd.f32 %v1096, %v1312
      %v1408 = vadd.f32 %v1102, %v1317
      %v1409 = vadd.f32 %v1108, %v1387
      %v1410 = vadd.f32 %v1114, %v1392
      %v1411 = vadd.f32 %v1120, %v1397
      %v1412 = vadd.f32 %v1126, %v1402
      %1413 = vmatprep.subr.mxu0 0.0
      %1414 = vmatpush1.msra.mxu0 0.0
      %1415 = vmatprep.subr.mxu0 0.0
      %1416 = vmatpush1.msra.mxu0 0.0
      %1417 = vmatprep.subr.mxu0 0.0
      %1418 = vmatpush1.msra.mxu0 0.0
      %1419 = vmatprep.subr.mxu0 0.0
      %1420 = vmatpush1.msra.mxu0 0.0
      %1421 = vmatprep.subr.mxu0 0.0
      %1422 = vmatpush1.msra.mxu0 0.0
      %1423 = vmatprep.subr.mxu0 0.0
      %1424 = vmatpush1.msra.mxu0 0.0
      %1425 = vmatprep.subr.mxu0 0.0
      %1426 = vmatpush1.msra.mxu0 0.0
      %1427 = vmatprep.subr.mxu0 0.0
      %1428 = vmatpush1.msra.mxu0 0.0
      %1429 = vmatprep.subr.mxu0 0.0
      %1430 = vmatpush1.msra.mxu0 0.0
      %1431 = vmatprep.subr.mxu0 0.0
      %1432 = vmatpush1.msra.mxu0 0.0
      %1433 = vmatprep.subr.mxu0 0.0
      %1434 = vmatpush1.msra.mxu0 0.0
      %1435 = vmatprep.subr.mxu0 0.0
      %1436 = vmatpush1.msra.mxu0 0.0
      %1437 = vmatprep.subr.mxu0 0.0
      %1438 = vmatpush1.msra.mxu0 %v1212
      %1439 = vmatprep.subr.mxu0 0.0
      %1440 = vmatpush1.msra.mxu0 %v1207
      %1441 = vmatprep.subr.mxu0 0.0
      %1442 = vmatpush1.msra.mxu0 %v1202
      %1443 = vmatprep.subr.mxu0 0.0
      %1444 = vmatpush1.msra.mxu0 %v1197
      %1445 = vmatprep.subr.mxu0 0.0
      %1446 = vmatpush2.msra.mxu0 0.0
      %1447 = vmatprep.subr.mxu0 0.0
      %1448 = vmatpush2.msra.mxu0 0.0
      %1449 = vmatprep.subr.mxu0 0.0
      %1450 = vmatpush2.msra.mxu0 0.0
      %1451 = vmatprep.subr.mxu0 0.0
      %1452 = vmatpush2.msra.mxu0 0.0
      %1453 = vmatprep.subr.mxu0 0.0
      %1454 = vmatpush2.msra.mxu0 0.0
      %1455 = vmatprep.subr.mxu0 0.0
      %1456 = vmatpush2.msra.mxu0 0.0
      %1457 = vmatprep.subr.mxu0 0.0
      %1458 = vmatpush2.msra.mxu0 0.0
      %1459 = vmatprep.subr.mxu0 0.0
      %1460 = vmatpush2.msra.mxu0 0.0
      %1461 = vmatprep.subr.mxu0 0.0
      %1462 = vmatpush2.msra.mxu0 0.0
      %1463 = vmatprep.subr.mxu0 0.0
      %1464 = vmatpush2.msra.mxu0 0.0
      %1465 = vmatprep.subr.mxu0 0.0
      %1466 = vmatpush2.msra.mxu0 0.0
      %1467 = vmatprep.subr.mxu0 0.0
      %1468 = vmatpush2.msra.mxu0 0.0
      %1469 = vmatprep.subr.mxu0 0.0
      %1470 = vmatpush2.msra.mxu0 0.0
      %1471 = vmatprep.subr.mxu0 0.0
      %1472 = vmatpush2.msra.mxu0 0.0
      %1473 = vmatprep.subr.mxu0 0.0
      %1474 = vmatpush2.msra.mxu0 0.0
      %1475 = vmatprep.subr.mxu0 0.0
      %1476 = vmatpush2.msra.mxu0 0.0
      %1477 = vmatprep.mubr.f32.mxu0 0.0
      %1478 = vmatmul.mubr.f32.gmra.mxu0 %v808
      %v1479 = vpop.f32.mrf.mxu0
      %v1480 = vadd.f32 0.0, %v1479
      %v1481 = vpop.f32.mrf.mxu0
      %1482 = vmatprep.mubr.f32.mxu0 0.0
      %1483 = vmatmul.mubr.f32.gmra.mxu0 %v811
      %v1484 = vpop.f32.mrf.mxu0
      %v1485 = vadd.f32 0.0, %v1484
      %v1486 = vpop.f32.mrf.mxu0
      %1487 = vmatprep.mubr.f32.mxu0 0.0
      %1488 = vmatmul.mubr.f32.gmra.mxu0 %v814
      %v1489 = vpop.f32.mrf.mxu0
      %v1490 = vadd.f32 0.0, %v1489
      %v1491 = vpop.f32.mrf.mxu0
      %1492 = vmatprep.mubr.f32.mxu0 0.0
      %1493 = vmatmul.mubr.f32.gmra.mxu0 %v817
      %v1494 = vpop.f32.mrf.mxu0
      %v1495 = vadd.f32 0.0, %v1494
      %v1496 = vpop.f32.mrf.mxu0
      %1497 = vdwg.mxu0
      %1498 = vmatprep.subr.mxu0 0.0
      %1499 = vmatpush1.msra.mxu0 0.0
      %1500 = vmatprep.subr.mxu0 0.0
      %1501 = vmatpush1.msra.mxu0 0.0
      %1502 = vmatprep.subr.mxu0 0.0
      %1503 = vmatpush1.msra.mxu0 0.0
      %1504 = vmatprep.subr.mxu0 0.0
      %1505 = vmatpush1.msra.mxu0 0.0
      %1506 = vmatprep.subr.mxu0 0.0
      %1507 = vmatpush1.msra.mxu0 0.0
      %1508 = vmatprep.subr.mxu0 0.0
      %1509 = vmatpush1.msra.mxu0 0.0
      %1510 = vmatprep.subr.mxu0 0.0
      %1511 = vmatpush1.msra.mxu0 0.0
      %1512 = vmatprep.subr.mxu0 0.0
      %1513 = vmatpush1.msra.mxu0 0.0
      %1514 = vmatprep.subr.mxu0 0.0
      %1515 = vmatpush1.msra.mxu0 0.0
      %1516 = vmatprep.subr.mxu0 0.0
      %1517 = vmatpush1.msra.mxu0 0.0
      %1518 = vmatprep.subr.mxu0 0.0
      %1519 = vmatpush1.msra.mxu0 0.0
      %1520 = vmatprep.subr.mxu0 0.0
      %1521 = vmatpush1.msra.mxu0 0.0
      %1522 = vmatprep.subr.mxu0 0.0
      %1523 = vmatpush1.msra.mxu0 %v1232
      %1524 = vmatprep.subr.mxu0 0.0
      %1525 = vmatpush1.msra.mxu0 %v1227
      %1526 = vmatprep.subr.mxu0 0.0
      %1527 = vmatpush1.msra.mxu0 %v1222
      %1528 = vmatprep.subr.mxu0 0.0
      %1529 = vmatpush1.msra.mxu0 %v1217
      %1530 = vmatprep.subr.mxu0 0.0
      %1531 = vmatpush2.msra.mxu0 0.0
      %1532 = vmatprep.subr.mxu0 0.0
      %1533 = vmatpush2.msra.mxu0 0.0
      %1534 = vmatprep.subr.mxu0 0.0
      %1535 = vmatpush2.msra.mxu0 0.0
      %1536 = vmatprep.subr.mxu0 0.0
      %1537 = vmatpush2.msra.mxu0 0.0
      %1538 = vmatprep.subr.mxu0 0.0
      %1539 = vmatpush2.msra.mxu0 0.0
      %1540 = vmatprep.subr.mxu0 0.0
      %1541 = vmatpush2.msra.mxu0 0.0
      %1542 = vmatprep.subr.mxu0 0.0
      %1543 = vmatpush2.msra.mxu0 0.0
      %1544 = vmatprep.subr.mxu0 0.0
      %1545 = vmatpush2.msra.mxu0 0.0
      %1546 = vmatprep.subr.mxu0 0.0
      %1547 = vmatpush2.msra.mxu0 0.0
      %1548 = vmatprep.subr.mxu0 0.0
      %1549 = vmatpush2.msra.mxu0 0.0
      %1550 = vmatprep.subr.mxu0 0.0
      %1551 = vmatpush2.msra.mxu0 0.0
      %1552 = vmatprep.subr.mxu0 0.0
      %1553 = vmatpush2.msra.mxu0 0.0
      %1554 = vmatprep.subr.mxu0 0.0
      %1555 = vmatpush2.msra.mxu0 0.0
      %1556 = vmatprep.subr.mxu0 0.0
      %1557 = vmatpush2.msra.mxu0 0.0
      %1558 = vmatprep.subr.mxu0 0.0
      %1559 = vmatpush2.msra.mxu0 0.0
      %1560 = vmatprep.subr.mxu0 0.0
      %1561 = vmatpush2.msra.mxu0 0.0
      %1562 = vmatprep.mubr.f32.mxu0 0.0
      %1563 = vmatmul.mubr.f32.gmra.mxu0 %v905
      %v1564 = vpop.f32.mrf.mxu0
      %v1565 = vadd.f32 0.0, %v1564
      %v1566 = vpop.f32.mrf.mxu0
      %1567 = vmatprep.mubr.f32.mxu0 0.0
      %1568 = vmatmul.mubr.f32.gmra.mxu0 %v908
      %v1569 = vpop.f32.mrf.mxu0
      %v1570 = vadd.f32 0.0, %v1569
      %v1571 = vpop.f32.mrf.mxu0
      %1572 = vmatprep.mubr.f32.mxu0 0.0
      %1573 = vmatmul.mubr.f32.gmra.mxu0 %v911
      %v1574 = vpop.f32.mrf.mxu0
      %v1575 = vadd.f32 0.0, %v1574
      %v1576 = vpop.f32.mrf.mxu0
      %1577 = vmatprep.mubr.f32.mxu0 0.0
      %1578 = vmatmul.mubr.f32.gmra.mxu0 %v914
      %v1579 = vpop.f32.mrf.mxu0
      %v1580 = vadd.f32 0.0, %v1579
      %v1581 = vpop.f32.mrf.mxu0
      %1582 = vdwg.mxu0
      %v1583 = vadd.f32 %v1405, %v1480
      %v1584 = vadd.f32 %v1406, %v1485
      %v1585 = vadd.f32 %v1407, %v1490
      %v1586 = vadd.f32 %v1408, %v1495
      %v1587 = vadd.f32 %v1409, %v1565
      %v1588 = vadd.f32 %v1410, %v1570
      %v1589 = vadd.f32 %v1411, %v1575
      %v1590 = vadd.f32 %v1412, %v1580
      %v1591 = vlaneseq
      %v1592 = vand.u32 %v1591, 127
      %vm1593 = vcmp.lt.s32.totalorder %v1592, 8
      %v1594 = vsel %vm1593, %v1583, -1e+30
      %v1595 = vsel %vm1593, %v1584, -1e+30
      %v1596 = vsel %vm1593, %v1585, -1e+30
      %v1597 = vsel %vm1593, %v1586, -1e+30
      %v1598 = vsel %vm1593, %v1587, -1e+30
      %v1599 = vsel %vm1593, %v1588, -1e+30
      %v1600 = vsel %vm1593, %v1589, -1e+30
      %v1601 = vsel %vm1593, %v1590, -1e+30
      %1602 = vmax.xlane.f32.xlu0 %v1594
      %v1603 = vpop.xlane.xlu0 %1602
      %1604 = vmax.xlane.f32.xlu0 %v1595
      %v1605 = vpop.xlane.xlu0 %1604
      %1606 = vmax.xlane.f32.xlu0 %v1596
      %v1607 = vpop.xlane.xlu0 %1606
      %1608 = vmax.xlane.f32.xlu0 %v1597
      %v1609 = vpop.xlane.xlu0 %1608
      %1610 = vmax.xlane.f32.xlu0 %v1598
      %v1611 = vpop.xlane.xlu0 %1610
      %1612 = vmax.xlane.f32.xlu0 %v1599
      %v1613 = vpop.xlane.xlu0 %1612
      %1614 = vmax.xlane.f32.xlu0 %v1600
      %v1615 = vpop.xlane.xlu0 %1614
      %1616 = vmax.xlane.f32.xlu0 %v1601
      %v1617 = vpop.xlane.xlu0 %1616
      %v1618 = vsub.f32 %v1594, %v1603
      %v1619 = vsub.f32 %v1595, %v1605
      %v1620 = vsub.f32 %v1596, %v1607
      %v1621 = vsub.f32 %v1597, %v1609
      %v1622 = vsub.f32 %v1598, %v1611
      %v1623 = vsub.f32 %v1599, %v1613
      %v1624 = vsub.f32 %v1600, %v1615
      %v1625 = vsub.f32 %v1601, %v1617
      %v1626 = vmul.f32 %v1618, 1.442695
      %v1627 = vpow.pop %v1626
      %v1628 = vmul.f32 %v1619, 1.442695
      %v1629 = vpow.pop %v1628
      %v1630 = vmul.f32 %v1620, 1.442695
      %v1631 = vpow.pop %v1630
      %v1632 = vmul.f32 %v1621, 1.442695
      %v1633 = vpow.pop %v1632
      %v1634 = vmul.f32 %v1622, 1.442695
      %v1635 = vpow.pop %v1634
      %v1636 = vmul.f32 %v1623, 1.442695
      %v1637 = vpow.pop %v1636
      %v1638 = vmul.f32 %v1624, 1.442695
      %v1639 = vpow.pop %v1638
      %v1640 = vmul.f32 %v1625, 1.442695
      %v1641 = vpow.pop %v1640
      %1642 = vadd.xlane.f32.xlu0 %v1627
      %v1643 = vpop.xlane.xlu0 %1642
      %1644 = vadd.xlane.f32.xlu0 %v1629
      %v1645 = vpop.xlane.xlu0 %1644
      %1646 = vadd.xlane.f32.xlu0 %v1631
      %v1647 = vpop.xlane.xlu0 %1646
      %1648 = vadd.xlane.f32.xlu0 %v1633
      %v1649 = vpop.xlane.xlu0 %1648
      %1650 = vadd.xlane.f32.xlu0 %v1635
      %v1651 = vpop.xlane.xlu0 %1650
      %1652 = vadd.xlane.f32.xlu0 %v1637
      %v1653 = vpop.xlane.xlu0 %1652
      %1654 = vadd.xlane.f32.xlu0 %v1639
      %v1655 = vpop.xlane.xlu0 %1654
      %1656 = vadd.xlane.f32.xlu0 %v1641
      %v1657 = vpop.xlane.xlu0 %1656
      %v1658 = vlog2.pop %v1643
      %v1659 = vmul.f32 %v1658, 0.6931472
      %v1660 = vlog2.pop %v1645
      %v1661 = vmul.f32 %v1660, 0.6931472
      %v1662 = vlog2.pop %v1647
      %v1663 = vmul.f32 %v1662, 0.6931472
      %v1664 = vlog2.pop %v1649
      %v1665 = vmul.f32 %v1664, 0.6931472
      %v1666 = vlog2.pop %v1651
      %v1667 = vmul.f32 %v1666, 0.6931472
      %v1668 = vlog2.pop %v1653
      %v1669 = vmul.f32 %v1668, 0.6931472
      %v1670 = vlog2.pop %v1655
      %v1671 = vmul.f32 %v1670, 0.6931472
      %v1672 = vlog2.pop %v1657
      %v1673 = vmul.f32 %v1672, 0.6931472
      %v1674 = vsub.f32 %v1618, %v1659
      %v1675 = vsub.f32 %v1619, %v1661
      %v1676 = vsub.f32 %v1620, %v1663
      %v1677 = vsub.f32 %v1621, %v1665
      %v1678 = vsub.f32 %v1622, %v1667
      %v1679 = vsub.f32 %v1623, %v1669
      %v1680 = vsub.f32 %v1624, %v1671
      %v1681 = vsub.f32 %v1625, %v1673
      %v1682 = vrcp.pop %v1643
      %v1683 = vrcp.pop %v1645
      %v1684 = vrcp.pop %v1647
      %v1685 = vrcp.pop %v1649
      %v1686 = vrcp.pop %v1651
      %v1687 = vrcp.pop %v1653
      %v1688 = vrcp.pop %v1655
      %v1689 = vrcp.pop %v1657
      %v1690 = vmul.f32 %v1627, %v1682
      %v1691 = vmul.f32 %v1629, %v1683
      %v1692 = vmul.f32 %v1631, %v1684
      %v1693 = vmul.f32 %v1633, %v1685
      %v1694 = vmul.f32 %v1635, %v1686
      %v1695 = vmul.f32 %v1637, %v1687
      %v1696 = vmul.f32 %v1639, %v1688
      %v1697 = vmul.f32 %v1641, %v1689
      %1698 = vst [vmem:[%s281] sm:$0xff] %v1690
      %1699 = vst [vmem:[%s281 + $0x10] sm:$0xff] %v1691
      %1700 = vst [vmem:[%s281 + $0x20] sm:$0xff] %v1692
      %1701 = vst [vmem:[%s281 + $0x30] sm:$0xff] %v1693
      %1702 = vst [vmem:[%s281 + $0x40] sm:$0xff] %v1694
      %1703 = vst [vmem:[%s281 + $0x50] sm:$0xff] %v1695
      %1704 = vst [vmem:[%s281 + $0x60] sm:$0xff] %v1696
      %1705 = vst [vmem:[%s281 + $0x70] sm:$0xff] %v1697
      %1706 = vst [vmem:[%s281 + $0x8] sm:$0xff] %v1674
      %1707 = vst [vmem:[%s281 + $0x18] sm:$0xff] %v1675
      %1708 = vst [vmem:[%s281 + $0x28] sm:$0xff] %v1676
      %1709 = vst [vmem:[%s281 + $0x38] sm:$0xff] %v1677
      %1710 = vst [vmem:[%s281 + $0x48] sm:$0xff] %v1678
      %1711 = vst [vmem:[%s281 + $0x58] sm:$0xff] %v1679
      %1712 = vst [vmem:[%s281 + $0x68] sm:$0xff] %v1680
      %1713 = vst [vmem:[%s281 + $0x78] sm:$0xff] %v1681
      %s1714 = smul.u32 2, %s16
      %p1715 = scmp.lt.s32.totalorder %s1714, 3
      %s1716 = scalar_select %p1715, %s1714, 3
      %s1717 = smul.addr %s1716, 8
      %s1718 = smul.addr %s1717, 8
      %s1719 = scalar_lea.vmem %s5, %s1718
      // Predicated region
      $region41: #{group_gcn_forward_batched.1} parent=39 // pred_check
        %p1720 = pneg %p154
      $region42: #{group_gcn_forward_batched.1} parent=39 // pred_check_branch
        %1722 = sbr.rel (%p1720) target = $region44
      $region43: #{group_gcn_forward_batched.1} parent=39 // pred_region
        %s1723 = smul.u32 2, %s16
      $region44: #{group_gcn_forward_batched.1} parent=39 // pred_fallthru
        _
    $region40: #{group_gcn_forward_batched.1} parent=5 // pred_fallthru
      _
    %p1724 = scmp.le.s32.totalorder 2, %s11
    // Predicated region
    $region45: #{group_gcn_forward_batched.1} parent=5 // pred_check
      %p1725 = pneg %p1724
    $region46: #{group_gcn_forward_batched.1} parent=5 // pred_check_branch
      %1727 = sbr.rel (%p1725) target = $region48
    $region47: #{group_gcn_forward_batched.1} parent=5 // pred_region
      %s1728 = ssub.s32 %s11, 2
      // Predicated region
      $region49: #{group_gcn_forward_batched.1} parent=47 // pred_check
        %p1729 = pneg %p160
      $region50: #{group_gcn_forward_batched.1} parent=47 // pred_check_branch
        %1731 = sbr.rel (%p1729) target = $region52
      $region51: #{group_gcn_forward_batched.1} parent=47 // pred_region
        %s1732 = smul.u32 2, %s17
        %p1733 = scmp.lt.s32.totalorder %s1732, 3
        %s1734 = scalar_select %p1733, %s1732, 3
        %s1735 = smul.addr %s1734, 8
        %s1736 = smul.addr %s1735, 8
        %s1737 = scalar_lea.vmem %s5, %s1736
      $region52: #{group_gcn_forward_batched.1} parent=47 // pred_fallthru
        _
    $region48: #{group_gcn_forward_batched.1} parent=5 // pred_fallthru
      _
  $region6: #{group_gcn_forward_batched.1} parent=0 // loop_footer
    %s15 = sadd.s32 1, %s11
  $region7: #{group_gcn_forward_batched.1} parent=0 // loop_footer_branch
    %10 = sbr.rel target = $region3
  $region8: #{group_gcn_forward_batched.1} parent=0 // loop_exit
    _

</llo_original>
